<compile_context>
chip_gen: v5e
topology: v5e:2x2
jax: 0.10.0
libtpu: 0.0.40
codegen_flags: <defaults>
</compile_context>

<pallas_src>
import functools

import jax
import jax.numpy as jnp
from jax.experimental import pallas as pl
from jax.experimental.pallas import tpu as pltpu


def _value_net_kernel(x_ref, w1_ref, b1_ref, w2_ref, b2_ref, w3_ref, b3_ref,
                      out_ref):
    cd = w1_ref.dtype  # compute (matmul input) dtype: bf16 or f32

    # Layer 1: Linear + ReLU  (f32 accumulate, bias add + ReLU in f32)
    x = x_ref[...].astype(cd)
    h = jnp.dot(x, w1_ref[...], preferred_element_type=jnp.float32) + b1_ref[...]
    h = jnp.maximum(h, 0.0).astype(cd)

    # Layer 2: Linear + ReLU
    h = jnp.dot(h, w2_ref[...], preferred_element_type=jnp.float32) + b2_ref[...]
    h = jnp.maximum(h, 0.0).astype(cd)

    # Output layer: lane-dense (256 -> 128 padded columns, column 0 is real).
    # b3 is a scalar read from SMEM and broadcast on the VPU.
    o = jnp.dot(h, w3_ref[...], preferred_element_type=jnp.float32) + b3_ref[0]
    out_ref[...] = o.astype(out_ref.dtype)


def value_net_forward(x, params, *, block_batch=512,
                      compute_dtype=jnp.bfloat16):
    """x: (B, input_size). Returns (B,) float32 (flattened Q-values)."""
    (w1, b1), (w2, b2), (w3, b3) = params

    x = x.astype(jnp.float32)
    B, F = x.shape
    H1 = w1.shape[1]
    H2 = w2.shape[1]
    OUT_LANES = 128  # lane-dense output slab; only column 0 is the real Q-value

    cd = jnp.dtype(compute_dtype)

    # Weight / bias preparation (cheap; constant-folded under jit).
    w1c = w1.astype(cd)
    w2c = w2.astype(cd)
    w3p = jnp.zeros((H2, OUT_LANES), cd).at[:, 0].set(
        w3.reshape(H2).astype(cd))
    b1f = b1.reshape(1, H1).astype(jnp.float32)
    b2f = b2.reshape(1, H2).astype(jnp.float32)
    b3s = b3.reshape(1).astype(jnp.float32)          # scalar, goes to SMEM

    # Batch tiling: pad B up to a multiple of TB so every tile is full-extent.
    TB = int(block_batch)
    Bp = pl.cdiv(B, TB) * TB
    if Bp != B:
        x = jnp.pad(x, ((0, Bp - B), (0, 0)))
    num_tiles = Bp // TB

    flops = int(2 * Bp * (F * H1 + H1 * H2 + H2 * OUT_LANES))
    bytes_accessed = int(
        Bp * F * 4                                        # x (f32 in HBM)
        + (F * H1 + H1 * H2 + H2 * OUT_LANES) * cd.itemsize  # weights
        + (H1 + H2 + 1) * 4                               # biases
        + Bp * OUT_LANES * 4                              # output writes
    )

    out = pl.pallas_call(
        _value_net_kernel,
        out_shape=jax.ShapeDtypeStruct((Bp, OUT_LANES), jnp.float32),
        grid=(num_tiles,),
        in_specs=[
            pl.BlockSpec((TB, F), lambda i: (i, 0)),          # x: streamed
            pl.BlockSpec((F, H1), lambda i: (0, 0)),          # w1: resident
            pl.BlockSpec((1, H1), lambda i: (0, 0)),          # b1
            pl.BlockSpec((H1, H2), lambda i: (0, 0)),         # w2
            pl.BlockSpec((1, H2), lambda i: (0, 0)),          # b2
            pl.BlockSpec((H2, OUT_LANES), lambda i: (0, 0)),  # w3 (padded)
            pl.BlockSpec(memory_space=pltpu.MemorySpace.SMEM),  # b3 scalar
        ],
        out_specs=pl.BlockSpec((TB, OUT_LANES), lambda i: (i, 0)),
        compiler_params=pltpu.CompilerParams(
            dimension_semantics=("parallel",)),
        cost_estimate=pl.CostEstimate(flops=flops, transcendentals=0,
                                      bytes_accessed=bytes_accessed),
    )(x, w1c, b1f, w2c, b2f, w3p, b3s)

    # Column 0 holds the Q-values; matches torch's x.flatten() on (B, 1).
    return out[:B, 0]


def init_params(key, input_size, hidden_dims):
    """Deterministic init mimicking nn.Linear default U(-1/sqrt(fan_in), +...)."""
    dims = [input_size] + list(hidden_dims) + [1]
    params = []
    for i in range(len(dims) - 1):
        fan_in, fan_out = dims[i], dims[i + 1]
        key, kw, kb = jax.random.split(key, 3)
        bound = 1.0 / jnp.sqrt(jnp.float32(fan_in))
        w = jax.random.uniform(kw, (fan_in, fan_out), jnp.float32,
                               minval=-bound, maxval=bound)
        b = jax.random.uniform(kb, (1, fan_out), jnp.float32,
                               minval=-bound, maxval=bound)
        params.append((w, b))
    return params


def value_net_reference(x, params):
    """Pure-JAX f32 reference for correctness check."""
    h = x.astype(jnp.float32)
    for i, (w, b) in enumerate(params):
        h = h @ w + b
        if i < len(params) - 1:
            h = jnp.maximum(h, 0.0)
    return h.reshape(-1)


if __name__ == "__main__":
    # module defaults: max_agents=5, m_types=8, hidden_dims=[256, 256]
    state_size = 13
    max_agents = 5
    m_types = 8
    hidden_dims = [256, 256]
    input_size = state_size + 2 + 1 + 2 + 1 + m_types + max_agents  # = 32

    batch = 8  # small test batch; wrapper pads up to the 512-row tile

    key = jax.random.PRNGKey(0)
    kx, kp = jax.random.split(key)
    x = jax.random.normal(kx, (batch, input_size), jnp.float32)
    params = init_params(kp, input_size, hidden_dims)

    ref = value_net_reference(x, params)

    # f32 path (exact, e.g. v5e): tight tolerance.
    fwd_f32 = jax.jit(functools.partial(value_net_forward, params=params,
                                        compute_dtype=jnp.float32))
    out_f32 = fwd_f32(x)
    jax.block_until_ready(out_f32)
    assert out_f32.shape == (batch,)
    assert jnp.allclose(out_f32, ref, atol=1e-4, rtol=1e-4)

    # bf16 path (default; v6e/v7x MXU fast path): loose tolerance vs f32 ref.
    fwd_bf16 = jax.jit(functools.partial(value_net_forward, params=params,
                                         compute_dtype=jnp.bfloat16))
    out_bf16 = fwd_bf16(x)
    jax.block_until_ready(out_bf16)
    assert out_bf16.shape == (batch,)
    assert jnp.allclose(out_bf16, ref, atol=5e-2, rtol=5e-2)

    print("KERNEL_OK")
</pallas_src>

<mosaic_0001>
module attributes {stable_mosaic.version = 11 : i64} {
  func.func @_value_net_kernel(%arg0: i32, %arg1: memref<512x32xf32, #tpu.memory_space<vmem>>, %arg2: memref<32x256xf32, #tpu.memory_space<vmem>>, %arg3: memref<1x256xf32, #tpu.memory_space<vmem>>, %arg4: memref<256x256xf32, #tpu.memory_space<vmem>>, %arg5: memref<1x256xf32, #tpu.memory_space<vmem>>, %arg6: memref<256x128xf32, #tpu.memory_space<vmem>>, %arg7: memref<1xf32, #tpu.memory_space<smem>>, %arg8: memref<512x128xf32, #tpu.memory_space<vmem>>) attributes {dimension_semantics = [#tpu.dimension_semantics<parallel>], iteration_bounds = array<i64: 1>, scalar_prefetch = 0 : i64, scratch_operands = 0 : i64, tpu.core_type = #tpu.core_type<tc>, window_params = [{transform_indices = @transform_0, window_bounds = array<i64: 512, 32>}, {pipeline_mode = #tpu.pipeline_mode<synchronous>, transform_indices = @transform_1, window_bounds = array<i64: 32, 256>}, {pipeline_mode = #tpu.pipeline_mode<synchronous>, transform_indices = @transform_2, window_bounds = array<i64: 1, 256>}, {pipeline_mode = #tpu.pipeline_mode<synchronous>, transform_indices = @transform_3, window_bounds = array<i64: 256, 256>}, {pipeline_mode = #tpu.pipeline_mode<synchronous>, transform_indices = @transform_4, window_bounds = array<i64: 1, 256>}, {pipeline_mode = #tpu.pipeline_mode<synchronous>, transform_indices = @transform_5, window_bounds = array<i64: 256, 128>}, {transform_indices = @transform_6, window_bounds = array<i64: 1>}, {transform_indices = @transform_7, window_bounds = array<i64: 512, 128>}]} {
    %c0 = arith.constant 0 : index
    %c0_0 = arith.constant 0 : index
    %0 = vector.load %arg1[%c0, %c0_0] : memref<512x32xf32, #tpu.memory_space<vmem>>, vector<512x32xf32>
    %c0_1 = arith.constant 0 : index
    %c0_2 = arith.constant 0 : index
    %1 = vector.load %arg2[%c0_1, %c0_2] : memref<32x256xf32, #tpu.memory_space<vmem>>, vector<32x256xf32>
    %cst = arith.constant dense<0.000000e+00> : vector<512x256xf32>
    %2 = tpu.matmul %0, %1, %cst {dimension_numbers = #tpu.dot_dimension_numbers<[1], [0], [0], [1], [0, 0, 1, 1], [], []>} : vector<512x32xf32>, vector<32x256xf32>, vector<512x256xf32> -> vector<512x256xf32>
    %c0_3 = arith.constant 0 : index
    %c0_4 = arith.constant 0 : index
    %3 = vector.load %arg3[%c0_3, %c0_4] : memref<1x256xf32, #tpu.memory_space<vmem>>, vector<1x256xf32>
    %4 = vector.broadcast %3 : vector<1x256xf32> to vector<512x256xf32>
    %5 = arith.addf %2, %4 : vector<512x256xf32>
    %cst_5 = arith.constant 0.000000e+00 : f32
    %6 = vector.broadcast %cst_5 : f32 to vector<512x256xf32>
    %7 = arith.maximumf %5, %6 : vector<512x256xf32>
    %c0_6 = arith.constant 0 : index
    %c0_7 = arith.constant 0 : index
    %8 = vector.load %arg4[%c0_6, %c0_7] : memref<256x256xf32, #tpu.memory_space<vmem>>, vector<256x256xf32>
    %cst_8 = arith.constant dense<0.000000e+00> : vector<512x256xf32>
    %9 = tpu.matmul %7, %8, %cst_8 {dimension_numbers = #tpu.dot_dimension_numbers<[1], [0], [0], [1], [0, 0, 1, 1], [], []>} : vector<512x256xf32>, vector<256x256xf32>, vector<512x256xf32> -> vector<512x256xf32>
    %c0_9 = arith.constant 0 : index
    %c0_10 = arith.constant 0 : index
    %10 = vector.load %arg5[%c0_9, %c0_10] : memref<1x256xf32, #tpu.memory_space<vmem>>, vector<1x256xf32>
    %11 = vector.broadcast %10 : vector<1x256xf32> to vector<512x256xf32>
    %12 = arith.addf %9, %11 : vector<512x256xf32>
    %cst_11 = arith.constant 0.000000e+00 : f32
    %13 = vector.broadcast %cst_11 : f32 to vector<512x256xf32>
    %14 = arith.maximumf %12, %13 : vector<512x256xf32>
    %c0_12 = arith.constant 0 : index
    %c0_13 = arith.constant 0 : index
    %15 = vector.load %arg6[%c0_12, %c0_13] : memref<256x128xf32, #tpu.memory_space<vmem>>, vector<256x128xf32>
    %cst_14 = arith.constant dense<0.000000e+00> : vector<512x128xf32>
    %16 = tpu.matmul %14, %15, %cst_14 {dimension_numbers = #tpu.dot_dimension_numbers<[1], [0], [0], [1], [0, 0, 1, 1], [], []>} : vector<512x256xf32>, vector<256x128xf32>, vector<512x128xf32> -> vector<512x128xf32>
    %c0_15 = arith.constant 0 : index
    %17 = memref.load %arg7[%c0_15] : memref<1xf32, #tpu.memory_space<smem>>
    %18 = vector.broadcast %17 : f32 to vector<512x128xf32>
    %19 = arith.addf %16, %18 : vector<512x128xf32>
    %c0_16 = arith.constant 0 : index
    %c0_17 = arith.constant 0 : index
    %20 = vector.load %arg8[%c0_16, %c0_17] : memref<512x128xf32, #tpu.memory_space<vmem>>, vector<512x128xf32>
    tpu.vector_store %arg8[%c0_16, %c0_17], %19 {strides = array<i32>} : memref<512x128xf32, #tpu.memory_space<vmem>>, vector<512x128xf32>,
    return
  }
  func.func @transform_0(%arg0: i32) -> (i32, i32) {
    %c0_i32 = arith.constant 0 : i32
    %c0_i32_0 = arith.constant 0 : i32
    return %arg0, %c0_i32 : i32, i32
  }
  func.func @transform_1(%arg0: i32) -> (i32, i32) {
    %c0_i32 = arith.constant 0 : i32
    %c0_i32_0 = arith.constant 0 : i32
    %c0_i32_1 = arith.constant 0 : i32
    return %c0_i32, %c0_i32_0 : i32, i32
  }
  func.func @transform_2(%arg0: i32) -> (i32, i32) {
    %c0_i32 = arith.constant 0 : i32
    %c0_i32_0 = arith.constant 0 : i32
    %c0_i32_1 = arith.constant 0 : i32
    return %c0_i32, %c0_i32_0 : i32, i32
  }
  func.func @transform_3(%arg0: i32) -> (i32, i32) {
    %c0_i32 = arith.constant 0 : i32
    %c0_i32_0 = arith.constant 0 : i32
    %c0_i32_1 = arith.constant 0 : i32
    return %c0_i32, %c0_i32_0 : i32, i32
  }
  func.func @transform_4(%arg0: i32) -> (i32, i32) {
    %c0_i32 = arith.constant 0 : i32
    %c0_i32_0 = arith.constant 0 : i32
    %c0_i32_1 = arith.constant 0 : i32
    return %c0_i32, %c0_i32_0 : i32, i32
  }
  func.func @transform_5(%arg0: i32) -> (i32, i32) {
    %c0_i32 = arith.constant 0 : i32
    %c0_i32_0 = arith.constant 0 : i32
    %c0_i32_1 = arith.constant 0 : i32
    return %c0_i32, %c0_i32_0 : i32, i32
  }
  func.func @transform_6(%arg0: i32) -> i32 {
    %c0_i32 = arith.constant 0 : i32
    %c0_i32_0 = arith.constant 0 : i32
    return %c0_i32 : i32
  }
  func.func @transform_7(%arg0: i32) -> (i32, i32) {
    %c0_i32 = arith.constant 0 : i32
    %c0_i32_0 = arith.constant 0 : i32
    return %arg0, %c0_i32 : i32, i32
  }
}

</mosaic_0001>

<llo_original>
// kernel: value_net_forward.1
$region0: #{value_net_forward.1}
  #allocation0 [shape = 'u32[]', space=smem, size = 0x4, offset = 0x4, fixed_abs, tag = 'smem constant byte address 0x4 - core index']
  #allocation1 [shape = 'u32[72,128]{1,0:T(1,128)}', space=vmem, size = 0x9000, scoped, tag = 'internal scratch']
  #allocation2 [shape = 'f32[1]{0:T(128)S(6)}', space=smem, size = 0x200, scoped, tag = 'scoped memory for value_net_forward.1']
  %s0 = inlined_call_operand.vmem [shape: f32[512,32], index: 0, kind: input, shape index: {}]
  %s1 = inlined_call_operand.vmem [shape: f32[32,256], index: 1, kind: input, shape index: {}]
  %s2 = inlined_call_operand.vmem [shape: f32[1,256], index: 2, kind: input, shape index: {}]
  %s3 = inlined_call_operand.vmem [shape: f32[256,256], index: 3, kind: input, shape index: {}]
  %s4 = inlined_call_operand.vmem [shape: f32[1,256], index: 4, kind: input, shape index: {}]
  %s5 = inlined_call_operand.vmem [shape: f32[256,128], index: 5, kind: input, shape index: {}]
  %s6 = inlined_call_operand.<no memory space> [shape: f32[1], index: 6, kind: input, shape index: {}]
  %s7 = inlined_call_operand.vmem [shape: f32[512,128], index: 7, kind: output, shape index: {}]
  %s8 = sld [smem:[#allocation0]]
  $region38: #{value_net_forward.1} parent=0
    _
  %s10 = ssub.s32 1, %s8
  %s11 = scalar_select 0, %s10, %s8
  %12 = sst [smem:[#allocation2]] %s6
  // Predicated region
  $region2: #{value_net_forward.1} parent=0 // pred_check
    _
  $region3: #{value_net_forward.1} parent=0 // pred_check_branch
    %14 = sbr.rel (0) target = $region5
  $region4: #{value_net_forward.1} parent=0 // pred_region
    _
  $region5: #{value_net_forward.1} parent=0 // pred_fallthru
    _
  // Predicated region
  $region6: #{value_net_forward.1} parent=0 // pred_check
    _
  $region7: #{value_net_forward.1} parent=0 // pred_check_branch
    %16 = sbr.rel (0) target = $region9
  $region8: #{value_net_forward.1} parent=0 // pred_region
    _
  $region9: #{value_net_forward.1} parent=0 // pred_fallthru
    _
  // Predicated region
  $region10: #{value_net_forward.1} parent=0 // pred_check
    _
  $region11: #{value_net_forward.1} parent=0 // pred_check_branch
    %18 = sbr.rel (0) target = $region13
  $region12: #{value_net_forward.1} parent=0 // pred_region
    _
  $region13: #{value_net_forward.1} parent=0 // pred_fallthru
    _
  // Predicated region
  $region14: #{value_net_forward.1} parent=0 // pred_check
    _
  $region15: #{value_net_forward.1} parent=0 // pred_check_branch
    %20 = sbr.rel (0) target = $region17
  $region16: #{value_net_forward.1} parent=0 // pred_region
    _
  $region17: #{value_net_forward.1} parent=0 // pred_fallthru
    _
  // Predicated region
  $region18: #{value_net_forward.1} parent=0 // pred_check
    _
  $region19: #{value_net_forward.1} parent=0 // pred_check_branch
    %22 = sbr.rel (0) target = $region21
  $region20: #{value_net_forward.1} parent=0 // pred_region
    _
  $region21: #{value_net_forward.1} parent=0 // pred_fallthru
    _
  // Predicated region
  $region22: #{value_net_forward.1} parent=0 // pred_check
    _
  $region23: #{value_net_forward.1} parent=0 // pred_check_branch
    %24 = sbr.rel (0) target = $region25
  $region24: #{value_net_forward.1} parent=0 // pred_region
    _
  $region25: #{value_net_forward.1} parent=0 // pred_fallthru
    _
  // Predicated region
  $region26: #{value_net_forward.1} parent=0 // pred_check
    _
  $region27: #{value_net_forward.1} parent=0 // pred_check_branch
    %26 = sbr.rel (0) target = $region29
  $region28: #{value_net_forward.1} parent=0 // pred_region
    _
  $region29: #{value_net_forward.1} parent=0 // pred_fallthru
    _
  %v27 = vld [vmem:[%s0] sm:$0xff]
  %v28 = vld [vmem:[%s0 + $0x8] sm:$0xff]
  %v29 = vld [vmem:[%s0 + $0x10] sm:$0xff]
  %v30 = vld [vmem:[%s0 + $0x18] sm:$0xff]
  %v31 = vld [vmem:[%s0 + $0x20] sm:$0xff]
  %v32 = vld [vmem:[%s0 + $0x28] sm:$0xff]
  %v33 = vld [vmem:[%s0 + $0x30] sm:$0xff]
  %v34 = vld [vmem:[%s0 + $0x38] sm:$0xff]
  %v35 = vld [vmem:[%s0 + $0x40] sm:$0xff]
  %v36 = vld [vmem:[%s0 + $0x48] sm:$0xff]
  %v37 = vld [vmem:[%s0 + $0x50] sm:$0xff]
  %v38 = vld [vmem:[%s0 + $0x58] sm:$0xff]
  %v39 = vld [vmem:[%s0 + $0x60] sm:$0xff]
  %v40 = vld [vmem:[%s0 + $0x68] sm:$0xff]
  %v41 = vld [vmem:[%s0 + $0x70] sm:$0xff]
  %v42 = vld [vmem:[%s0 + $0x78] sm:$0xff]
  %v43 = vld [vmem:[%s0 + $0x80] sm:$0xff]
  %v44 = vld [vmem:[%s0 + $0x88] sm:$0xff]
  %v45 = vld [vmem:[%s0 + $0x90] sm:$0xff]
  %v46 = vld [vmem:[%s0 + $0x98] sm:$0xff]
  %v47 = vld [vmem:[%s0 + $0xa0] sm:$0xff]
  %v48 = vld [vmem:[%s0 + $0xa8] sm:$0xff]
  %v49 = vld [vmem:[%s0 + $0xb0] sm:$0xff]
  %v50 = vld [vmem:[%s0 + $0xb8] sm:$0xff]
  %v51 = vld [vmem:[%s0 + $0xc0] sm:$0xff]
  %v52 = vld [vmem:[%s0 + $0xc8] sm:$0xff]
  %v53 = vld [vmem:[%s0 + $0xd0] sm:$0xff]
  %v54 = vld [vmem:[%s0 + $0xd8] sm:$0xff]
  %v55 = vld [vmem:[%s0 + $0xe0] sm:$0xff]
  %v56 = vld [vmem:[%s0 + $0xe8] sm:$0xff]
  %v57 = vld [vmem:[%s0 + $0xf0] sm:$0xff]
  %v58 = vld [vmem:[%s0 + $0xf8] sm:$0xff]
  %v59 = vld [vmem:[%s0 + $0x100] sm:$0xff]
  %v60 = vld [vmem:[%s0 + $0x108] sm:$0xff]
  %v61 = vld [vmem:[%s0 + $0x110] sm:$0xff]
  %v62 = vld [vmem:[%s0 + $0x118] sm:$0xff]
  %v63 = vld [vmem:[%s0 + $0x120] sm:$0xff]
  %v64 = vld [vmem:[%s0 + $0x128] sm:$0xff]
  %v65 = vld [vmem:[%s0 + $0x130] sm:$0xff]
  %v66 = vld [vmem:[%s0 + $0x138] sm:$0xff]
  %v67 = vld [vmem:[%s0 + $0x140] sm:$0xff]
  %v68 = vld [vmem:[%s0 + $0x148] sm:$0xff]
  %v69 = vld [vmem:[%s0 + $0x150] sm:$0xff]
  %v70 = vld [vmem:[%s0 + $0x158] sm:$0xff]
  %v71 = vld [vmem:[%s0 + $0x160] sm:$0xff]
  %v72 = vld [vmem:[%s0 + $0x168] sm:$0xff]
  %v73 = vld [vmem:[%s0 + $0x170] sm:$0xff]
  %v74 = vld [vmem:[%s0 + $0x178] sm:$0xff]
  %v75 = vld [vmem:[%s0 + $0x180] sm:$0xff]
  %v76 = vld [vmem:[%s0 + $0x188] sm:$0xff]
  %v77 = vld [vmem:[%s0 + $0x190] sm:$0xff]
  %v78 = vld [vmem:[%s0 + $0x198] sm:$0xff]
  %v79 = vld [vmem:[%s0 + $0x1a0] sm:$0xff]
  %v80 = vld [vmem:[%s0 + $0x1a8] sm:$0xff]
  %v81 = vld [vmem:[%s0 + $0x1b0] sm:$0xff]
  %v82 = vld [vmem:[%s0 + $0x1b8] sm:$0xff]
  %v83 = vld [vmem:[%s0 + $0x1c0] sm:$0xff]
  %v84 = vld [vmem:[%s0 + $0x1c8] sm:$0xff]
  %v85 = vld [vmem:[%s0 + $0x1d0] sm:$0xff]
  %v86 = vld [vmem:[%s0 + $0x1d8] sm:$0xff]
  %v87 = vld [vmem:[%s0 + $0x1e0] sm:$0xff]
  %v88 = vld [vmem:[%s0 + $0x1e8] sm:$0xff]
  %v89 = vld [vmem:[%s0 + $0x1f0] sm:$0xff]
  %v90 = vld [vmem:[%s0 + $0x1f8] sm:$0xff]
  %v91 = vld [vmem:[%s1] sm:$0xff]
  %v92 = vld [vmem:[%s1 + $0x8] sm:$0xff]
  %v93 = vld [vmem:[%s1 + $0x10] sm:$0xff]
  %v94 = vld [vmem:[%s1 + $0x18] sm:$0xff]
  %v95 = vld [vmem:[%s1 + $0x20] sm:$0xff]
  %v96 = vld [vmem:[%s1 + $0x28] sm:$0xff]
  %v97 = vld [vmem:[%s1 + $0x30] sm:$0xff]
  %v98 = vld [vmem:[%s1 + $0x38] sm:$0xff]
  %v99 = vld [vmem:[%s2] sm:$0x3]
  %v101 = vperm.slane %v99, 0
  %v102 = vperm.slane %v99, 1
  %vm105 = vcmask 261120
  %v107 = vsel %vm105, %v27, 0
  %v110 = vsel %vm105, %v28, 0
  %v113 = vsel %vm105, %v29, 0
  %v116 = vsel %vm105, %v30, 0
  %v119 = vsel %vm105, %v31, 0
  %v122 = vsel %vm105, %v32, 0
  %v125 = vsel %vm105, %v33, 0
  %v128 = vsel %vm105, %v34, 0
  %v131 = vsel %vm105, %v35, 0
  %v134 = vsel %vm105, %v36, 0
  %v137 = vsel %vm105, %v37, 0
  %v140 = vsel %vm105, %v38, 0
  %v143 = vsel %vm105, %v39, 0
  %v146 = vsel %vm105, %v40, 0
  %v149 = vsel %vm105, %v41, 0
  %v152 = vsel %vm105, %v42, 0
  %v155 = vsel %vm105, %v43, 0
  %v158 = vsel %vm105, %v44, 0
  %v161 = vsel %vm105, %v45, 0
  %v164 = vsel %vm105, %v46, 0
  %v167 = vsel %vm105, %v47, 0
  %v170 = vsel %vm105, %v48, 0
  %v173 = vsel %vm105, %v49, 0
  %v176 = vsel %vm105, %v50, 0
  %v179 = vsel %vm105, %v51, 0
  %v182 = vsel %vm105, %v52, 0
  %v185 = vsel %vm105, %v53, 0
  %v188 = vsel %vm105, %v54, 0
  %v191 = vsel %vm105, %v55, 0
  %v194 = vsel %vm105, %v56, 0
  %v197 = vsel %vm105, %v57, 0
  %v200 = vsel %vm105, %v58, 0
  %v203 = vsel %vm105, %v59, 0
  %v206 = vsel %vm105, %v60, 0
  %v209 = vsel %vm105, %v61, 0
  %v212 = vsel %vm105, %v62, 0
  %v215 = vsel %vm105, %v63, 0
  %v218 = vsel %vm105, %v64, 0
  %v221 = vsel %vm105, %v65, 0
  %v224 = vsel %vm105, %v66, 0
  %v227 = vsel %vm105, %v67, 0
  %v230 = vsel %vm105, %v68, 0
  %v233 = vsel %vm105, %v69, 0
  %v236 = vsel %vm105, %v70, 0
  %v239 = vsel %vm105, %v71, 0
  %v242 = vsel %vm105, %v72, 0
  %v245 = vsel %vm105, %v73, 0
  %v248 = vsel %vm105, %v74, 0
  %v251 = vsel %vm105, %v75, 0
  %v254 = vsel %vm105, %v76, 0
  %v257 = vsel %vm105, %v77, 0
  %v260 = vsel %vm105, %v78, 0
  %v263 = vsel %vm105, %v79, 0
  %v266 = vsel %vm105, %v80, 0
  %v269 = vsel %vm105, %v81, 0
  %v272 = vsel %vm105, %v82, 0
  %v275 = vsel %vm105, %v83, 0
  %v278 = vsel %vm105, %v84, 0
  %v281 = vsel %vm105, %v85, 0
  %v284 = vsel %vm105, %v86, 0
  %v287 = vsel %vm105, %v87, 0
  %v290 = vsel %vm105, %v88, 0
  %v293 = vsel %vm105, %v89, 0
  %v296 = vsel %vm105, %v90, 0
  %298 = vmatpush.msra.mxu0 0.0
  %299 = vmatpush.msra.mxu0 0.0
  %300 = vmatpush.msra.mxu0 0.0
  %301 = vmatpush.msra.mxu0 0.0
  %302 = vmatpush.msra.mxu0 0.0
  %303 = vmatpush.msra.mxu0 0.0
  %304 = vmatpush.msra.mxu0 0.0
  %305 = vmatpush.msra.mxu0 0.0
  %306 = vmatpush.msra.mxu0 0.0
  %307 = vmatpush.msra.mxu0 0.0
  %308 = vmatpush.msra.mxu0 0.0
  %309 = vmatpush.msra.mxu0 0.0
  %310 = vmatpush.msra.mxu0 %v97
  %311 = vmatpush.msra.mxu0 %v95
  %312 = vmatpush.msra.mxu0 %v93
  %313 = vmatpush.msra.mxu0 %v91
  %314 = vmatmul.f32.gmra.mxu0 %v107
  %v315 = vpop.f32.mrf.mxu0
  %v316 = vadd.f32 %v101, %v315
  %317 = vmatmul.f32.gmra.mxu0 %v110
  %v318 = vpop.f32.mrf.mxu0
  %v319 = vadd.f32 %v101, %v318
  %320 = vmatmul.f32.gmra.mxu0 %v113
  %v321 = vpop.f32.mrf.mxu0
  %v322 = vadd.f32 %v101, %v321
  %323 = vmatmul.f32.gmra.mxu0 %v116
  %v324 = vpop.f32.mrf.mxu0
  %v325 = vadd.f32 %v101, %v324
  %326 = vmatmul.f32.gmra.mxu0 %v119
  %v327 = vpop.f32.mrf.mxu0
  %v328 = vadd.f32 %v101, %v327
  %329 = vmatmul.f32.gmra.mxu0 %v122
  %v330 = vpop.f32.mrf.mxu0
  %v331 = vadd.f32 %v101, %v330
  %332 = vmatmul.f32.gmra.mxu0 %v125
  %v333 = vpop.f32.mrf.mxu0
  %v334 = vadd.f32 %v101, %v333
  %335 = vmatmul.f32.gmra.mxu0 %v128
  %v336 = vpop.f32.mrf.mxu0
  %v337 = vadd.f32 %v101, %v336
  %338 = vmatmul.f32.gmra.mxu0 %v131
  %v339 = vpop.f32.mrf.mxu0
  %v340 = vadd.f32 %v101, %v339
  %341 = vmatmul.f32.gmra.mxu0 %v134
  %v342 = vpop.f32.mrf.mxu0
  %v343 = vadd.f32 %v101, %v342
  %344 = vmatmul.f32.gmra.mxu0 %v137
  %v345 = vpop.f32.mrf.mxu0
  %v346 = vadd.f32 %v101, %v345
  %347 = vmatmul.f32.gmra.mxu0 %v140
  %v348 = vpop.f32.mrf.mxu0
  %v349 = vadd.f32 %v101, %v348
  %350 = vmatmul.f32.gmra.mxu0 %v143
  %v351 = vpop.f32.mrf.mxu0
  %v352 = vadd.f32 %v101, %v351
  %353 = vmatmul.f32.gmra.mxu0 %v146
  %v354 = vpop.f32.mrf.mxu0
  %v355 = vadd.f32 %v101, %v354
  %356 = vmatmul.f32.gmra.mxu0 %v149
  %v357 = vpop.f32.mrf.mxu0
  %v358 = vadd.f32 %v101, %v357
  %359 = vmatmul.f32.gmra.mxu0 %v152
  %v360 = vpop.f32.mrf.mxu0
  %v361 = vadd.f32 %v101, %v360
  %362 = vmatmul.f32.gmra.mxu0 %v155
  %v363 = vpop.f32.mrf.mxu0
  %v364 = vadd.f32 %v101, %v363
  %365 = vmatmul.f32.gmra.mxu0 %v158
  %v366 = vpop.f32.mrf.mxu0
  %v367 = vadd.f32 %v101, %v366
  %368 = vmatmul.f32.gmra.mxu0 %v161
  %v369 = vpop.f32.mrf.mxu0
  %v370 = vadd.f32 %v101, %v369
  %371 = vmatmul.f32.gmra.mxu0 %v164
  %v372 = vpop.f32.mrf.mxu0
  %v373 = vadd.f32 %v101, %v372
  %374 = vmatmul.f32.gmra.mxu0 %v167
  %v375 = vpop.f32.mrf.mxu0
  %v376 = vadd.f32 %v101, %v375
  %377 = vmatmul.f32.gmra.mxu0 %v170
  %v378 = vpop.f32.mrf.mxu0
  %v379 = vadd.f32 %v101, %v378
  %380 = vmatmul.f32.gmra.mxu0 %v173
  %v381 = vpop.f32.mrf.mxu0
  %v382 = vadd.f32 %v101, %v381
  %383 = vmatmul.f32.gmra.mxu0 %v176
  %v384 = vpop.f32.mrf.mxu0
  %v385 = vadd.f32 %v101, %v384
  %386 = vmatmul.f32.gmra.mxu0 %v179
  %v387 = vpop.f32.mrf.mxu0
  %v388 = vadd.f32 %v101, %v387
  %389 = vmatmul.f32.gmra.mxu0 %v182
  %v390 = vpop.f32.mrf.mxu0
  %v391 = vadd.f32 %v101, %v390
  %392 = vmatmul.f32.gmra.mxu0 %v185
  %v393 = vpop.f32.mrf.mxu0
  %v394 = vadd.f32 %v101, %v393
  %395 = vmatmul.f32.gmra.mxu0 %v188
  %v396 = vpop.f32.mrf.mxu0
  %v397 = vadd.f32 %v101, %v396
  %398 = vmatmul.f32.gmra.mxu0 %v191
  %v399 = vpop.f32.mrf.mxu0
  %v400 = vadd.f32 %v101, %v399
  %401 = vmatmul.f32.gmra.mxu0 %v194
  %v402 = vpop.f32.mrf.mxu0
  %v403 = vadd.f32 %v101, %v402
  %404 = vmatmul.f32.gmra.mxu0 %v197
  %v405 = vpop.f32.mrf.mxu0
  %v406 = vadd.f32 %v101, %v405
  %407 = vmatmul.f32.gmra.mxu0 %v200
  %v408 = vpop.f32.mrf.mxu0
  %v409 = vadd.f32 %v101, %v408
  %410 = vmatmul.f32.gmra.mxu0 %v203
  %v411 = vpop.f32.mrf.mxu0
  %v412 = vadd.f32 %v101, %v411
  %413 = vmatmul.f32.gmra.mxu0 %v206
  %v414 = vpop.f32.mrf.mxu0
  %v415 = vadd.f32 %v101, %v414
  %416 = vmatmul.f32.gmra.mxu0 %v209
  %v417 = vpop.f32.mrf.mxu0
  %v418 = vadd.f32 %v101, %v417
  %419 = vmatmul.f32.gmra.mxu0 %v212
  %v420 = vpop.f32.mrf.mxu0
  %v421 = vadd.f32 %v101, %v420
  %422 = vmatmul.f32.gmra.mxu0 %v215
  %v423 = vpop.f32.mrf.mxu0
  %v424 = vadd.f32 %v101, %v423
  %425 = vmatmul.f32.gmra.mxu0 %v218
  %v426 = vpop.f32.mrf.mxu0
  %v427 = vadd.f32 %v101, %v426
  %428 = vmatmul.f32.gmra.mxu0 %v221
  %v429 = vpop.f32.mrf.mxu0
  %v430 = vadd.f32 %v101, %v429
  %431 = vmatmul.f32.gmra.mxu0 %v224
  %v432 = vpop.f32.mrf.mxu0
  %v433 = vadd.f32 %v101, %v432
  %434 = vmatmul.f32.gmra.mxu0 %v227
  %v435 = vpop.f32.mrf.mxu0
  %v436 = vadd.f32 %v101, %v435
  %437 = vmatmul.f32.gmra.mxu0 %v230
  %v438 = vpop.f32.mrf.mxu0
  %v439 = vadd.f32 %v101, %v438
  %440 = vmatmul.f32.gmra.mxu0 %v233
  %v441 = vpop.f32.mrf.mxu0
  %v442 = vadd.f32 %v101, %v441
  %443 = vmatmul.f32.gmra.mxu0 %v236
  %v444 = vpop.f32.mrf.mxu0
  %v445 = vadd.f32 %v101, %v444
  %446 = vmatmul.f32.gmra.mxu0 %v239
  %v447 = vpop.f32.mrf.mxu0
  %v448 = vadd.f32 %v101, %v447
  %449 = vmatmul.f32.gmra.mxu0 %v242
  %v450 = vpop.f32.mrf.mxu0
  %v451 = vadd.f32 %v101, %v450
  %452 = vmatmul.f32.gmra.mxu0 %v245
  %v453 = vpop.f32.mrf.mxu0
  %v454 = vadd.f32 %v101, %v453
  %455 = vmatmul.f32.gmra.mxu0 %v248
  %v456 = vpop.f32.mrf.mxu0
  %v457 = vadd.f32 %v101, %v456
  %458 = vmatmul.f32.gmra.mxu0 %v251
  %v459 = vpop.f32.mrf.mxu0
  %v460 = vadd.f32 %v101, %v459
  %461 = vmatmul.f32.gmra.mxu0 %v254
  %v462 = vpop.f32.mrf.mxu0
  %v463 = vadd.f32 %v101, %v462
  %464 = vmatmul.f32.gmra.mxu0 %v257
  %v465 = vpop.f32.mrf.mxu0
  %v466 = vadd.f32 %v101, %v465
  %467 = vmatmul.f32.gmra.mxu0 %v260
  %v468 = vpop.f32.mrf.mxu0
  %v469 = vadd.f32 %v101, %v468
  %470 = vmatmul.f32.gmra.mxu0 %v263
  %v471 = vpop.f32.mrf.mxu0
  %v472 = vadd.f32 %v101, %v471
  %473 = vmatmul.f32.gmra.mxu0 %v266
  %v474 = vpop.f32.mrf.mxu0
  %v475 = vadd.f32 %v101, %v474
  %476 = vmatmul.f32.gmra.mxu0 %v269
  %v477 = vpop.f32.mrf.mxu0
  %v478 = vadd.f32 %v101, %v477
  %479 = vmatmul.f32.gmra.mxu0 %v272
  %v480 = vpop.f32.mrf.mxu0
  %v481 = vadd.f32 %v101, %v480
  %482 = vmatmul.f32.gmra.mxu0 %v275
  %v483 = vpop.f32.mrf.mxu0
  %v484 = vadd.f32 %v101, %v483
  %485 = vmatmul.f32.gmra.mxu0 %v278
  %v486 = vpop.f32.mrf.mxu0
  %v487 = vadd.f32 %v101, %v486
  %488 = vmatmul.f32.gmra.mxu0 %v281
  %v489 = vpop.f32.mrf.mxu0
  %v490 = vadd.f32 %v101, %v489
  %491 = vmatmul.f32.gmra.mxu0 %v284
  %v492 = vpop.f32.mrf.mxu0
  %v493 = vadd.f32 %v101, %v492
  %494 = vmatmul.f32.gmra.mxu0 %v287
  %v495 = vpop.f32.mrf.mxu0
  %v496 = vadd.f32 %v101, %v495
  %497 = vmatmul.f32.gmra.mxu0 %v290
  %v498 = vpop.f32.mrf.mxu0
  %v499 = vadd.f32 %v101, %v498
  %500 = vmatmul.f32.gmra.mxu0 %v293
  %v501 = vpop.f32.mrf.mxu0
  %v502 = vadd.f32 %v101, %v501
  %503 = vmatmul.f32.gmra.mxu0 %v296
  %v504 = vpop.f32.mrf.mxu0
  %v505 = vadd.f32 %v101, %v504
  %506 = vdwg.mxu0
  %507 = vmatpush.msra.mxu0 0.0
  %508 = vmatpush.msra.mxu0 0.0
  %509 = vmatpush.msra.mxu0 0.0
  %510 = vmatpush.msra.mxu0 0.0
  %511 = vmatpush.msra.mxu0 0.0
  %512 = vmatpush.msra.mxu0 0.0
  %513 = vmatpush.msra.mxu0 0.0
  %514 = vmatpush.msra.mxu0 0.0
  %515 = vmatpush.msra.mxu0 0.0
  %516 = vmatpush.msra.mxu0 0.0
  %517 = vmatpush.msra.mxu0 0.0
  %518 = vmatpush.msra.mxu0 0.0
  %519 = vmatpush.msra.mxu0 %v98
  %520 = vmatpush.msra.mxu0 %v96
  %521 = vmatpush.msra.mxu0 %v94
  %522 = vmatpush.msra.mxu0 %v92
  %523 = vmatmul.f32.gmra.mxu0 %v107
  %v524 = vpop.f32.mrf.mxu0
  %v525 = vadd.f32 %v102, %v524
  %526 = vmatmul.f32.gmra.mxu0 %v110
  %v527 = vpop.f32.mrf.mxu0
  %v528 = vadd.f32 %v102, %v527
  %529 = vmatmul.f32.gmra.mxu0 %v113
  %v530 = vpop.f32.mrf.mxu0
  %v531 = vadd.f32 %v102, %v530
  %532 = vmatmul.f32.gmra.mxu0 %v116
  %v533 = vpop.f32.mrf.mxu0
  %v534 = vadd.f32 %v102, %v533
  %535 = vmatmul.f32.gmra.mxu0 %v119
  %v536 = vpop.f32.mrf.mxu0
  %v537 = vadd.f32 %v102, %v536
  %538 = vmatmul.f32.gmra.mxu0 %v122
  %v539 = vpop.f32.mrf.mxu0
  %v540 = vadd.f32 %v102, %v539
  %541 = vmatmul.f32.gmra.mxu0 %v125
  %v542 = vpop.f32.mrf.mxu0
  %v543 = vadd.f32 %v102, %v542
  %544 = vmatmul.f32.gmra.mxu0 %v128
  %v545 = vpop.f32.mrf.mxu0
  %v546 = vadd.f32 %v102, %v545
  %547 = vmatmul.f32.gmra.mxu0 %v131
  %v548 = vpop.f32.mrf.mxu0
  %v549 = vadd.f32 %v102, %v548
  %550 = vmatmul.f32.gmra.mxu0 %v134
  %v551 = vpop.f32.mrf.mxu0
  %v552 = vadd.f32 %v102, %v551
  %553 = vmatmul.f32.gmra.mxu0 %v137
  %v554 = vpop.f32.mrf.mxu0
  %v555 = vadd.f32 %v102, %v554
  %556 = vmatmul.f32.gmra.mxu0 %v140
  %v557 = vpop.f32.mrf.mxu0
  %v558 = vadd.f32 %v102, %v557
  %559 = vmatmul.f32.gmra.mxu0 %v143
  %v560 = vpop.f32.mrf.mxu0
  %v561 = vadd.f32 %v102, %v560
  %562 = vmatmul.f32.gmra.mxu0 %v146
  %v563 = vpop.f32.mrf.mxu0
  %v564 = vadd.f32 %v102, %v563
  %565 = vmatmul.f32.gmra.mxu0 %v149
  %v566 = vpop.f32.mrf.mxu0
  %v567 = vadd.f32 %v102, %v566
  %568 = vmatmul.f32.gmra.mxu0 %v152
  %v569 = vpop.f32.mrf.mxu0
  %v570 = vadd.f32 %v102, %v569
  %571 = vmatmul.f32.gmra.mxu0 %v155
  %v572 = vpop.f32.mrf.mxu0
  %v573 = vadd.f32 %v102, %v572
  %574 = vmatmul.f32.gmra.mxu0 %v158
  %v575 = vpop.f32.mrf.mxu0
  %v576 = vadd.f32 %v102, %v575
  %577 = vmatmul.f32.gmra.mxu0 %v161
  %v578 = vpop.f32.mrf.mxu0
  %v579 = vadd.f32 %v102, %v578
  %580 = vmatmul.f32.gmra.mxu0 %v164
  %v581 = vpop.f32.mrf.mxu0
  %v582 = vadd.f32 %v102, %v581
  %583 = vmatmul.f32.gmra.mxu0 %v167
  %v584 = vpop.f32.mrf.mxu0
  %v585 = vadd.f32 %v102, %v584
  %586 = vmatmul.f32.gmra.mxu0 %v170
  %v587 = vpop.f32.mrf.mxu0
  %v588 = vadd.f32 %v102, %v587
  %589 = vmatmul.f32.gmra.mxu0 %v173
  %v590 = vpop.f32.mrf.mxu0
  %v591 = vadd.f32 %v102, %v590
  %592 = vmatmul.f32.gmra.mxu0 %v176
  %v593 = vpop.f32.mrf.mxu0
  %v594 = vadd.f32 %v102, %v593
  %595 = vmatmul.f32.gmra.mxu0 %v179
  %v596 = vpop.f32.mrf.mxu0
  %v597 = vadd.f32 %v102, %v596
  %598 = vmatmul.f32.gmra.mxu0 %v182
  %v599 = vpop.f32.mrf.mxu0
  %v600 = vadd.f32 %v102, %v599
  %601 = vmatmul.f32.gmra.mxu0 %v185
  %v602 = vpop.f32.mrf.mxu0
  %v603 = vadd.f32 %v102, %v602
  %604 = vmatmul.f32.gmra.mxu0 %v188
  %v605 = vpop.f32.mrf.mxu0
  %v606 = vadd.f32 %v102, %v605
  %607 = vmatmul.f32.gmra.mxu0 %v191
  %v608 = vpop.f32.mrf.mxu0
  %v609 = vadd.f32 %v102, %v608
  %610 = vmatmul.f32.gmra.mxu0 %v194
  %v611 = vpop.f32.mrf.mxu0
  %v612 = vadd.f32 %v102, %v611
  %613 = vmatmul.f32.gmra.mxu0 %v197
  %v614 = vpop.f32.mrf.mxu0
  %v615 = vadd.f32 %v102, %v614
  %616 = vmatmul.f32.gmra.mxu0 %v200
  %v617 = vpop.f32.mrf.mxu0
  %v618 = vadd.f32 %v102, %v617
  %619 = vmatmul.f32.gmra.mxu0 %v203
  %v620 = vpop.f32.mrf.mxu0
  %v621 = vadd.f32 %v102, %v620
  %622 = vmatmul.f32.gmra.mxu0 %v206
  %v623 = vpop.f32.mrf.mxu0
  %v624 = vadd.f32 %v102, %v623
  %625 = vmatmul.f32.gmra.mxu0 %v209
  %v626 = vpop.f32.mrf.mxu0
  %v627 = vadd.f32 %v102, %v626
  %628 = vmatmul.f32.gmra.mxu0 %v212
  %v629 = vpop.f32.mrf.mxu0
  %v630 = vadd.f32 %v102, %v629
  %631 = vmatmul.f32.gmra.mxu0 %v215
  %v632 = vpop.f32.mrf.mxu0
  %v633 = vadd.f32 %v102, %v632
  %634 = vmatmul.f32.gmra.mxu0 %v218
  %v635 = vpop.f32.mrf.mxu0
  %v636 = vadd.f32 %v102, %v635
  %637 = vmatmul.f32.gmra.mxu0 %v221
  %v638 = vpop.f32.mrf.mxu0
  %v639 = vadd.f32 %v102, %v638
  %640 = vmatmul.f32.gmra.mxu0 %v224
  %v641 = vpop.f32.mrf.mxu0
  %v642 = vadd.f32 %v102, %v641
  %643 = vmatmul.f32.gmra.mxu0 %v227
  %v644 = vpop.f32.mrf.mxu0
  %v645 = vadd.f32 %v102, %v644
  %646 = vmatmul.f32.gmra.mxu0 %v230
  %v647 = vpop.f32.mrf.mxu0
  %v648 = vadd.f32 %v102, %v647
  %649 = vmatmul.f32.gmra.mxu0 %v233
  %v650 = vpop.f32.mrf.mxu0
  %v651 = vadd.f32 %v102, %v650
  %652 = vmatmul.f32.gmra.mxu0 %v236
  %v653 = vpop.f32.mrf.mxu0
  %v654 = vadd.f32 %v102, %v653
  %655 = vmatmul.f32.gmra.mxu0 %v239
  %v656 = vpop.f32.mrf.mxu0
  %v657 = vadd.f32 %v102, %v656
  %658 = vmatmul.f32.gmra.mxu0 %v242
  %v659 = vpop.f32.mrf.mxu0
  %v660 = vadd.f32 %v102, %v659
  %661 = vmatmul.f32.gmra.mxu0 %v245
  %v662 = vpop.f32.mrf.mxu0
  %v663 = vadd.f32 %v102, %v662
  %664 = vmatmul.f32.gmra.mxu0 %v248
  %v665 = vpop.f32.mrf.mxu0
  %v666 = vadd.f32 %v102, %v665
  %667 = vmatmul.f32.gmra.mxu0 %v251
  %v668 = vpop.f32.mrf.mxu0
  %v669 = vadd.f32 %v102, %v668
  %670 = vmatmul.f32.gmra.mxu0 %v254
  %v671 = vpop.f32.mrf.mxu0
  %v672 = vadd.f32 %v102, %v671
  %673 = vmatmul.f32.gmra.mxu0 %v257
  %v674 = vpop.f32.mrf.mxu0
  %v675 = vadd.f32 %v102, %v674
  %676 = vmatmul.f32.gmra.mxu0 %v260
  %v677 = vpop.f32.mrf.mxu0
  %v678 = vadd.f32 %v102, %v677
  %679 = vmatmul.f32.gmra.mxu0 %v263
  %v680 = vpop.f32.mrf.mxu0
  %v681 = vadd.f32 %v102, %v680
  %682 = vmatmul.f32.gmra.mxu0 %v266
  %v683 = vpop.f32.mrf.mxu0
  %v684 = vadd.f32 %v102, %v683
  %685 = vmatmul.f32.gmra.mxu0 %v269
  %v686 = vpop.f32.mrf.mxu0
  %v687 = vadd.f32 %v102, %v686
  %688 = vmatmul.f32.gmra.mxu0 %v272
  %v689 = vpop.f32.mrf.mxu0
  %v690 = vadd.f32 %v102, %v689
  %691 = vmatmul.f32.gmra.mxu0 %v275
  %v692 = vpop.f32.mrf.mxu0
  %v693 = vadd.f32 %v102, %v692
  %694 = vmatmul.f32.gmra.mxu0 %v278
  %v695 = vpop.f32.mrf.mxu0
  %v696 = vadd.f32 %v102, %v695
  %697 = vmatmul.f32.gmra.mxu0 %v281
  %v698 = vpop.f32.mrf.mxu0
  %v699 = vadd.f32 %v102, %v698
  %700 = vmatmul.f32.gmra.mxu0 %v284
  %v701 = vpop.f32.mrf.mxu0
  %v702 = vadd.f32 %v102, %v701
  %703 = vmatmul.f32.gmra.mxu0 %v287
  %v704 = vpop.f32.mrf.mxu0
  %v705 = vadd.f32 %v102, %v704
  %706 = vmatmul.f32.gmra.mxu0 %v290
  %v707 = vpop.f32.mrf.mxu0
  %v708 = vadd.f32 %v102, %v707
  %709 = vmatmul.f32.gmra.mxu0 %v293
  %v710 = vpop.f32.mrf.mxu0
  %v711 = vadd.f32 %v102, %v710
  %712 = vmatmul.f32.gmra.mxu0 %v296
  %v713 = vpop.f32.mrf.mxu0
  %v714 = vadd.f32 %v102, %v713
  %715 = vdwg.mxu0
  %v716 = vmax.f32 %v316, 0.0
  %v717 = vmax.f32 %v525, 0.0
  %v718 = vmax.f32 %v319, 0.0
  %v719 = vmax.f32 %v528, 0.0
  %v720 = vmax.f32 %v322, 0.0
  %v721 = vmax.f32 %v531, 0.0
  %v722 = vmax.f32 %v325, 0.0
  %v723 = vmax.f32 %v534, 0.0
  %v724 = vmax.f32 %v328, 0.0
  %v725 = vmax.f32 %v537, 0.0
  %v726 = vmax.f32 %v331, 0.0
  %v727 = vmax.f32 %v540, 0.0
  %v728 = vmax.f32 %v334, 0.0
  %v729 = vmax.f32 %v543, 0.0
  %v730 = vmax.f32 %v337, 0.0
  %v731 = vmax.f32 %v546, 0.0
  %v732 = vmax.f32 %v340, 0.0
  %v733 = vmax.f32 %v549, 0.0
  %v734 = vmax.f32 %v343, 0.0
  %v735 = vmax.f32 %v552, 0.0
  %v736 = vmax.f32 %v346, 0.0
  %v737 = vmax.f32 %v555, 0.0
  %v738 = vmax.f32 %v349, 0.0
  %v739 = vmax.f32 %v558, 0.0
  %v740 = vmax.f32 %v352, 0.0
  %v741 = vmax.f32 %v561, 0.0
  %v742 = vmax.f32 %v355, 0.0
  %v743 = vmax.f32 %v564, 0.0
  %v744 = vmax.f32 %v358, 0.0
  %v745 = vmax.f32 %v567, 0.0
  %v746 = vmax.f32 %v361, 0.0
  %v747 = vmax.f32 %v570, 0.0
  %v748 = vmax.f32 %v364, 0.0
  %v749 = vmax.f32 %v573, 0.0
  %v750 = vmax.f32 %v367, 0.0
  %v751 = vmax.f32 %v576, 0.0
  %v752 = vmax.f32 %v370, 0.0
  %v753 = vmax.f32 %v579, 0.0
  %v754 = vmax.f32 %v373, 0.0
  %v755 = vmax.f32 %v582, 0.0
  %v756 = vmax.f32 %v376, 0.0
  %v757 = vmax.f32 %v585, 0.0
  %v758 = vmax.f32 %v379, 0.0
  %v759 = vmax.f32 %v588, 0.0
  %v760 = vmax.f32 %v382, 0.0
  %v761 = vmax.f32 %v591, 0.0
  %v762 = vmax.f32 %v385, 0.0
  %v763 = vmax.f32 %v594, 0.0
  %v764 = vmax.f32 %v388, 0.0
  %v765 = vmax.f32 %v597, 0.0
  %v766 = vmax.f32 %v391, 0.0
  %v767 = vmax.f32 %v600, 0.0
  %v768 = vmax.f32 %v394, 0.0
  %v769 = vmax.f32 %v603, 0.0
  %v770 = vmax.f32 %v397, 0.0
  %v771 = vmax.f32 %v606, 0.0
  %v772 = vmax.f32 %v400, 0.0
  %v773 = vmax.f32 %v609, 0.0
  %v774 = vmax.f32 %v403, 0.0
  %v775 = vmax.f32 %v612, 0.0
  %v776 = vmax.f32 %v406, 0.0
  %v777 = vmax.f32 %v615, 0.0
  %v778 = vmax.f32 %v409, 0.0
  %v779 = vmax.f32 %v618, 0.0
  %v780 = vmax.f32 %v412, 0.0
  %v781 = vmax.f32 %v621, 0.0
  %v782 = vmax.f32 %v415, 0.0
  %v783 = vmax.f32 %v624, 0.0
  %v784 = vmax.f32 %v418, 0.0
  %v785 = vmax.f32 %v627, 0.0
  %v786 = vmax.f32 %v421, 0.0
  %v787 = vmax.f32 %v630, 0.0
  %v788 = vmax.f32 %v424, 0.0
  %v789 = vmax.f32 %v633, 0.0
  %v790 = vmax.f32 %v427, 0.0
  %v791 = vmax.f32 %v636, 0.0
  %v792 = vmax.f32 %v430, 0.0
  %v793 = vmax.f32 %v639, 0.0
  %v794 = vmax.f32 %v433, 0.0
  %v795 = vmax.f32 %v642, 0.0
  %v796 = vmax.f32 %v436, 0.0
  %v797 = vmax.f32 %v645, 0.0
  %v798 = vmax.f32 %v439, 0.0
  %v799 = vmax.f32 %v648, 0.0
  %v800 = vmax.f32 %v442, 0.0
  %v801 = vmax.f32 %v651, 0.0
  %v802 = vmax.f32 %v445, 0.0
  %v803 = vmax.f32 %v654, 0.0
  %v804 = vmax.f32 %v448, 0.0
  %v805 = vmax.f32 %v657, 0.0
  %v806 = vmax.f32 %v451, 0.0
  %v807 = vmax.f32 %v660, 0.0
  %v808 = vmax.f32 %v454, 0.0
  %v809 = vmax.f32 %v663, 0.0
  %v810 = vmax.f32 %v457, 0.0
  %v811 = vmax.f32 %v666, 0.0
  %v812 = vmax.f32 %v460, 0.0
  %v813 = vmax.f32 %v669, 0.0
  %v814 = vmax.f32 %v463, 0.0
  %v815 = vmax.f32 %v672, 0.0
  %v816 = vmax.f32 %v466, 0.0
  %v817 = vmax.f32 %v675, 0.0
  %v818 = vmax.f32 %v469, 0.0
  %v819 = vmax.f32 %v678, 0.0
  %v820 = vmax.f32 %v472, 0.0
  %v821 = vmax.f32 %v681, 0.0
  %v822 = vmax.f32 %v475, 0.0
  %v823 = vmax.f32 %v684, 0.0
  %v824 = vmax.f32 %v478, 0.0
  %v825 = vmax.f32 %v687, 0.0
  %v826 = vmax.f32 %v481, 0.0
  %v827 = vmax.f32 %v690, 0.0
  %v828 = vmax.f32 %v484, 0.0
  %v829 = vmax.f32 %v693, 0.0
  %v830 = vmax.f32 %v487, 0.0
  %v831 = vmax.f32 %v696, 0.0
  %v832 = vmax.f32 %v490, 0.0
  %v833 = vmax.f32 %v699, 0.0
  %v834 = vmax.f32 %v493, 0.0
  %v835 = vmax.f32 %v702, 0.0
  %v836 = vmax.f32 %v496, 0.0
  %v837 = vmax.f32 %v705, 0.0
  %v838 = vmax.f32 %v499, 0.0
  %v839 = vmax.f32 %v708, 0.0
  %v840 = vmax.f32 %v502, 0.0
  %v841 = vmax.f32 %v711, 0.0
  %v842 = vmax.f32 %v505, 0.0
  %v843 = vmax.f32 %v714, 0.0
  %v844 = vld [vmem:[%s3] sm:$0xff]
  %v845 = vld [vmem:[%s3 + $0x8] sm:$0xff]
  %v846 = vld [vmem:[%s3 + $0x10] sm:$0xff]
  %v847 = vld [vmem:[%s3 + $0x18] sm:$0xff]
  %v848 = vld [vmem:[%s3 + $0x20] sm:$0xff]
  %v849 = vld [vmem:[%s3 + $0x28] sm:$0xff]
  %v850 = vld [vmem:[%s3 + $0x30] sm:$0xff]
  %v851 = vld [vmem:[%s3 + $0x38] sm:$0xff]
  %v852 = vld [vmem:[%s3 + $0x40] sm:$0xff]
  %v853 = vld [vmem:[%s3 + $0x48] sm:$0xff]
  %v854 = vld [vmem:[%s3 + $0x50] sm:$0xff]
  %v855 = vld [vmem:[%s3 + $0x58] sm:$0xff]
  %v856 = vld [vmem:[%s3 + $0x60] sm:$0xff]
  %v857 = vld [vmem:[%s3 + $0x68] sm:$0xff]
  %v858 = vld [vmem:[%s3 + $0x70] sm:$0xff]
  %v859 = vld [vmem:[%s3 + $0x78] sm:$0xff]
  %v860 = vld [vmem:[%s3 + $0x80] sm:$0xff]
  %v861 = vld [vmem:[%s3 + $0x88] sm:$0xff]
  %v862 = vld [vmem:[%s3 + $0x90] sm:$0xff]
  %v863 = vld [vmem:[%s3 + $0x98] sm:$0xff]
  %v864 = vld [vmem:[%s3 + $0xa0] sm:$0xff]
  %v865 = vld [vmem:[%s3 + $0xa8] sm:$0xff]
  %v866 = vld [vmem:[%s3 + $0xb0] sm:$0xff]
  %v867 = vld [vmem:[%s3 + $0xb8] sm:$0xff]
  %v868 = vld [vmem:[%s3 + $0xc0] sm:$0xff]
  %v869 = vld [vmem:[%s3 + $0xc8] sm:$0xff]
  %v870 = vld [vmem:[%s3 + $0xd0] sm:$0xff]
  %v871 = vld [vmem:[%s3 + $0xd8] sm:$0xff]
  %v872 = vld [vmem:[%s3 + $0xe0] sm:$0xff]
  %v873 = vld [vmem:[%s3 + $0xe8] sm:$0xff]
  %v874 = vld [vmem:[%s3 + $0xf0] sm:$0xff]
  %v875 = vld [vmem:[%s3 + $0xf8] sm:$0xff]
  %v876 = vld [vmem:[%s3 + $0x100] sm:$0xff]
  %v877 = vld [vmem:[%s3 + $0x108] sm:$0xff]
  %v878 = vld [vmem:[%s3 + $0x110] sm:$0xff]
  %v879 = vld [vmem:[%s3 + $0x118] sm:$0xff]
  %v880 = vld [vmem:[%s3 + $0x120] sm:$0xff]
  %v881 = vld [vmem:[%s3 + $0x128] sm:$0xff]
  %v882 = vld [vmem:[%s3 + $0x130] sm:$0xff]
  %v883 = vld [vmem:[%s3 + $0x138] sm:$0xff]
  %v884 = vld [vmem:[%s3 + $0x140] sm:$0xff]
  %v885 = vld [vmem:[%s3 + $0x148] sm:$0xff]
  %v886 = vld [vmem:[%s3 + $0x150] sm:$0xff]
  %v887 = vld [vmem:[%s3 + $0x158] sm:$0xff]
  %v888 = vld [vmem:[%s3 + $0x160] sm:$0xff]
  %v889 = vld [vmem:[%s3 + $0x168] sm:$0xff]
  %v890 = vld [vmem:[%s3 + $0x170] sm:$0xff]
  %v891 = vld [vmem:[%s3 + $0x178] sm:$0xff]
  %v892 = vld [vmem:[%s3 + $0x180] sm:$0xff]
  %v893 = vld [vmem:[%s3 + $0x188] sm:$0xff]
  %v894 = vld [vmem:[%s3 + $0x190] sm:$0xff]
  %v895 = vld [vmem:[%s3 + $0x198] sm:$0xff]
  %v896 = vld [vmem:[%s3 + $0x1a0] sm:$0xff]
  %v897 = vld [vmem:[%s3 + $0x1a8] sm:$0xff]
  %v898 = vld [vmem:[%s3 + $0x1b0] sm:$0xff]
  %v899 = vld [vmem:[%s3 + $0x1b8] sm:$0xff]
  %v900 = vld [vmem:[%s3 + $0x1c0] sm:$0xff]
  %v901 = vld [vmem:[%s3 + $0x1c8] sm:$0xff]
  %v902 = vld [vmem:[%s3 + $0x1d0] sm:$0xff]
  %v903 = vld [vmem:[%s3 + $0x1d8] sm:$0xff]
  %v904 = vld [vmem:[%s3 + $0x1e0] sm:$0xff]
  %v905 = vld [vmem:[%s3 + $0x1e8] sm:$0xff]
  %v906 = vld [vmem:[%s3 + $0x1f0] sm:$0xff]
  %v907 = vld [vmem:[%s3 + $0x1f8] sm:$0xff]
  %v908 = vld [vmem:[%s4] sm:$0x3]
  %v910 = vperm.slane %v908, 0
  %v911 = vperm.slane %v908, 1
  %914 = vmatpush.msra.mxu0 %v874
  %915 = vmatpush.msra.mxu0 %v872
  %916 = vmatpush.msra.mxu0 %v870
  %917 = vmatpush.msra.mxu0 %v868
  %918 = vmatpush.msra.mxu0 %v866
  %919 = vmatpush.msra.mxu0 %v864
  %920 = vmatpush.msra.mxu0 %v862
  %921 = vmatpush.msra.mxu0 %v860
  %922 = vmatpush.msra.mxu0 %v858
  %923 = vmatpush.msra.mxu0 %v856
  %924 = vmatpush.msra.mxu0 %v854
  %925 = vmatpush.msra.mxu0 %v852
  %926 = vmatpush.msra.mxu0 %v850
  %927 = vmatpush.msra.mxu0 %v848
  %928 = vmatpush.msra.mxu0 %v846
  %929 = vmatpush.msra.mxu0 %v844
  %930 = vmatmul.f32.gmra.mxu0 %v716
  %v931 = vpop.f32.mrf.mxu0
  %v932 = vadd.f32 %v910, %v931
  %933 = vmatmul.f32.gmra.mxu0 %v718
  %v934 = vpop.f32.mrf.mxu0
  %v935 = vadd.f32 %v910, %v934
  %936 = vmatmul.f32.gmra.mxu0 %v720
  %v937 = vpop.f32.mrf.mxu0
  %v938 = vadd.f32 %v910, %v937
  %939 = vmatmul.f32.gmra.mxu0 %v722
  %v940 = vpop.f32.mrf.mxu0
  %v941 = vadd.f32 %v910, %v940
  %942 = vmatmul.f32.gmra.mxu0 %v724
  %v943 = vpop.f32.mrf.mxu0
  %v944 = vadd.f32 %v910, %v943
  %945 = vmatmul.f32.gmra.mxu0 %v726
  %v946 = vpop.f32.mrf.mxu0
  %v947 = vadd.f32 %v910, %v946
  %948 = vmatmul.f32.gmra.mxu0 %v728
  %v949 = vpop.f32.mrf.mxu0
  %v950 = vadd.f32 %v910, %v949
  %951 = vmatmul.f32.gmra.mxu0 %v730
  %v952 = vpop.f32.mrf.mxu0
  %v953 = vadd.f32 %v910, %v952
  %954 = vmatmul.f32.gmra.mxu0 %v732
  %v955 = vpop.f32.mrf.mxu0
  %v956 = vadd.f32 %v910, %v955
  %957 = vmatmul.f32.gmra.mxu0 %v734
  %v958 = vpop.f32.mrf.mxu0
  %v959 = vadd.f32 %v910, %v958
  %960 = vmatmul.f32.gmra.mxu0 %v736
  %v961 = vpop.f32.mrf.mxu0
  %v962 = vadd.f32 %v910, %v961
  %963 = vmatmul.f32.gmra.mxu0 %v738
  %v964 = vpop.f32.mrf.mxu0
  %v965 = vadd.f32 %v910, %v964
  %966 = vmatmul.f32.gmra.mxu0 %v740
  %v967 = vpop.f32.mrf.mxu0
  %v968 = vadd.f32 %v910, %v967
  %969 = vmatmul.f32.gmra.mxu0 %v742
  %v970 = vpop.f32.mrf.mxu0
  %v971 = vadd.f32 %v910, %v970
  %972 = vmatmul.f32.gmra.mxu0 %v744
  %v973 = vpop.f32.mrf.mxu0
  %v974 = vadd.f32 %v910, %v973
  %975 = vmatmul.f32.gmra.mxu0 %v746
  %v976 = vpop.f32.mrf.mxu0
  %v977 = vadd.f32 %v910, %v976
  %978 = vmatmul.f32.gmra.mxu0 %v748
  %v979 = vpop.f32.mrf.mxu0
  %v980 = vadd.f32 %v910, %v979
  %981 = vmatmul.f32.gmra.mxu0 %v750
  %v982 = vpop.f32.mrf.mxu0
  %v983 = vadd.f32 %v910, %v982
  %984 = vmatmul.f32.gmra.mxu0 %v752
  %v985 = vpop.f32.mrf.mxu0
  %v986 = vadd.f32 %v910, %v985
  %987 = vmatmul.f32.gmra.mxu0 %v754
  %v988 = vpop.f32.mrf.mxu0
  %v989 = vadd.f32 %v910, %v988
  %990 = vmatmul.f32.gmra.mxu0 %v756
  %v991 = vpop.f32.mrf.mxu0
  %v992 = vadd.f32 %v910, %v991
  %993 = vmatmul.f32.gmra.mxu0 %v758
  %v994 = vpop.f32.mrf.mxu0
  %v995 = vadd.f32 %v910, %v994
  %996 = vmatmul.f32.gmra.mxu0 %v760
  %v997 = vpop.f32.mrf.mxu0
  %v998 = vadd.f32 %v910, %v997
  %999 = vmatmul.f32.gmra.mxu0 %v762
  %v1000 = vpop.f32.mrf.mxu0
  %v1001 = vadd.f32 %v910, %v1000
  %1002 = vmatmul.f32.gmra.mxu0 %v764
  %v1003 = vpop.f32.mrf.mxu0
  %v1004 = vadd.f32 %v910, %v1003
  %1005 = vmatmul.f32.gmra.mxu0 %v766
  %v1006 = vpop.f32.mrf.mxu0
  %v1007 = vadd.f32 %v910, %v1006
  %1008 = vmatmul.f32.gmra.mxu0 %v768
  %v1009 = vpop.f32.mrf.mxu0
  %v1010 = vadd.f32 %v910, %v1009
  %1011 = vmatmul.f32.gmra.mxu0 %v770
  %v1012 = vpop.f32.mrf.mxu0
  %v1013 = vadd.f32 %v910, %v1012
  %1014 = vmatmul.f32.gmra.mxu0 %v772
  %v1015 = vpop.f32.mrf.mxu0
  %v1016 = vadd.f32 %v910, %v1015
  %1017 = vmatmul.f32.gmra.mxu0 %v774
  %v1018 = vpop.f32.mrf.mxu0
  %v1019 = vadd.f32 %v910, %v1018
  %1020 = vmatmul.f32.gmra.mxu0 %v776
  %v1021 = vpop.f32.mrf.mxu0
  %v1022 = vadd.f32 %v910, %v1021
  %1023 = vmatmul.f32.gmra.mxu0 %v778
  %v1024 = vpop.f32.mrf.mxu0
  %v1025 = vadd.f32 %v910, %v1024
  %1026 = vmatmul.f32.gmra.mxu0 %v780
  %v1027 = vpop.f32.mrf.mxu0
  %v1028 = vadd.f32 %v910, %v1027
  %1029 = vmatmul.f32.gmra.mxu0 %v782
  %v1030 = vpop.f32.mrf.mxu0
  %v1031 = vadd.f32 %v910, %v1030
  %1032 = vmatmul.f32.gmra.mxu0 %v784
  %v1033 = vpop.f32.mrf.mxu0
  %v1034 = vadd.f32 %v910, %v1033
  %1035 = vmatmul.f32.gmra.mxu0 %v786
  %v1036 = vpop.f32.mrf.mxu0
  %v1037 = vadd.f32 %v910, %v1036
  %1038 = vmatmul.f32.gmra.mxu0 %v788
  %v1039 = vpop.f32.mrf.mxu0
  %v1040 = vadd.f32 %v910, %v1039
  %1041 = vmatmul.f32.gmra.mxu0 %v790
  %v1042 = vpop.f32.mrf.mxu0
  %v1043 = vadd.f32 %v910, %v1042
  %1044 = vmatmul.f32.gmra.mxu0 %v792
  %v1045 = vpop.f32.mrf.mxu0
  %v1046 = vadd.f32 %v910, %v1045
  %1047 = vmatmul.f32.gmra.mxu0 %v794
  %v1048 = vpop.f32.mrf.mxu0
  %v1049 = vadd.f32 %v910, %v1048
  %1050 = vmatmul.f32.gmra.mxu0 %v796
  %v1051 = vpop.f32.mrf.mxu0
  %v1052 = vadd.f32 %v910, %v1051
  %1053 = vmatmul.f32.gmra.mxu0 %v798
  %v1054 = vpop.f32.mrf.mxu0
  %v1055 = vadd.f32 %v910, %v1054
  %1056 = vmatmul.f32.gmra.mxu0 %v800
  %v1057 = vpop.f32.mrf.mxu0
  %v1058 = vadd.f32 %v910, %v1057
  %1059 = vmatmul.f32.gmra.mxu0 %v802
  %v1060 = vpop.f32.mrf.mxu0
  %v1061 = vadd.f32 %v910, %v1060
  %1062 = vmatmul.f32.gmra.mxu0 %v804
  %v1063 = vpop.f32.mrf.mxu0
  %v1064 = vadd.f32 %v910, %v1063
  %1065 = vmatmul.f32.gmra.mxu0 %v806
  %v1066 = vpop.f32.mrf.mxu0
  %v1067 = vadd.f32 %v910, %v1066
  %1068 = vmatmul.f32.gmra.mxu0 %v808
  %v1069 = vpop.f32.mrf.mxu0
  %v1070 = vadd.f32 %v910, %v1069
  %1071 = vmatmul.f32.gmra.mxu0 %v810
  %v1072 = vpop.f32.mrf.mxu0
  %v1073 = vadd.f32 %v910, %v1072
  %1074 = vmatmul.f32.gmra.mxu0 %v812
  %v1075 = vpop.f32.mrf.mxu0
  %v1076 = vadd.f32 %v910, %v1075
  %1077 = vmatmul.f32.gmra.mxu0 %v814
  %v1078 = vpop.f32.mrf.mxu0
  %v1079 = vadd.f32 %v910, %v1078
  %1080 = vmatmul.f32.gmra.mxu0 %v816
  %v1081 = vpop.f32.mrf.mxu0
  %v1082 = vadd.f32 %v910, %v1081
  %1083 = vmatmul.f32.gmra.mxu0 %v818
  %v1084 = vpop.f32.mrf.mxu0
  %v1085 = vadd.f32 %v910, %v1084
  %1086 = vmatmul.f32.gmra.mxu0 %v820
  %v1087 = vpop.f32.mrf.mxu0
  %v1088 = vadd.f32 %v910, %v1087
  %1089 = vmatmul.f32.gmra.mxu0 %v822
  %v1090 = vpop.f32.mrf.mxu0
  %v1091 = vadd.f32 %v910, %v1090
  %1092 = vmatmul.f32.gmra.mxu0 %v824
  %v1093 = vpop.f32.mrf.mxu0
  %v1094 = vadd.f32 %v910, %v1093
  %1095 = vmatmul.f32.gmra.mxu0 %v826
  %v1096 = vpop.f32.mrf.mxu0
  %v1097 = vadd.f32 %v910, %v1096
  %1098 = vmatmul.f32.gmra.mxu0 %v828
  %v1099 = vpop.f32.mrf.mxu0
  %v1100 = vadd.f32 %v910, %v1099
  %1101 = vmatmul.f32.gmra.mxu0 %v830
  %v1102 = vpop.f32.mrf.mxu0
  %v1103 = vadd.f32 %v910, %v1102
  %1104 = vmatmul.f32.gmra.mxu0 %v832
  %v1105 = vpop.f32.mrf.mxu0
  %v1106 = vadd.f32 %v910, %v1105
  %1107 = vmatmul.f32.gmra.mxu0 %v834
  %v1108 = vpop.f32.mrf.mxu0
  %v1109 = vadd.f32 %v910, %v1108
  %1110 = vmatmul.f32.gmra.mxu0 %v836
  %v1111 = vpop.f32.mrf.mxu0
  %v1112 = vadd.f32 %v910, %v1111
  %1113 = vmatmul.f32.gmra.mxu0 %v838
  %v1114 = vpop.f32.mrf.mxu0
  %v1115 = vadd.f32 %v910, %v1114
  %1116 = vmatmul.f32.gmra.mxu0 %v840
  %v1117 = vpop.f32.mrf.mxu0
  %v1118 = vadd.f32 %v910, %v1117
  %1119 = vmatmul.f32.gmra.mxu0 %v842
  %v1120 = vpop.f32.mrf.mxu0
  %v1121 = vadd.f32 %v910, %v1120
  %1122 = vdwg.mxu0
  %1123 = vmatpush.msra.mxu0 %v906
  %1124 = vmatpush.msra.mxu0 %v904
  %1125 = vmatpush.msra.mxu0 %v902
  %1126 = vmatpush.msra.mxu0 %v900
  %1127 = vmatpush.msra.mxu0 %v898
  %1128 = vmatpush.msra.mxu0 %v896
  %1129 = vmatpush.msra.mxu0 %v894
  %1130 = vmatpush.msra.mxu0 %v892
  %1131 = vmatpush.msra.mxu0 %v890
  %1132 = vmatpush.msra.mxu0 %v888
  %1133 = vmatpush.msra.mxu0 %v886
  %1134 = vmatpush.msra.mxu0 %v884
  %1135 = vmatpush.msra.mxu0 %v882
  %1136 = vmatpush.msra.mxu0 %v880
  %1137 = vmatpush.msra.mxu0 %v878
  %1138 = vmatpush.msra.mxu0 %v876
  %1139 = vmatmul.f32.gmra.mxu0 %v717
  %v1140 = vpop.f32.mrf.mxu0
  %v1141 = vadd.f32 %v932, %v1140
  %1142 = vmatmul.f32.gmra.mxu0 %v719
  %v1143 = vpop.f32.mrf.mxu0
  %v1144 = vadd.f32 %v935, %v1143
  %1145 = vmatmul.f32.gmra.mxu0 %v721
  %v1146 = vpop.f32.mrf.mxu0
  %v1147 = vadd.f32 %v938, %v1146
  %1148 = vmatmul.f32.gmra.mxu0 %v723
  %v1149 = vpop.f32.mrf.mxu0
  %v1150 = vadd.f32 %v941, %v1149
  %1151 = vmatmul.f32.gmra.mxu0 %v725
  %v1152 = vpop.f32.mrf.mxu0
  %v1153 = vadd.f32 %v944, %v1152
  %1154 = vmatmul.f32.gmra.mxu0 %v727
  %v1155 = vpop.f32.mrf.mxu0
  %v1156 = vadd.f32 %v947, %v1155
  %1157 = vmatmul.f32.gmra.mxu0 %v729
  %v1158 = vpop.f32.mrf.mxu0
  %v1159 = vadd.f32 %v950, %v1158
  %1160 = vmatmul.f32.gmra.mxu0 %v731
  %v1161 = vpop.f32.mrf.mxu0
  %v1162 = vadd.f32 %v953, %v1161
  %1163 = vmatmul.f32.gmra.mxu0 %v733
  %v1164 = vpop.f32.mrf.mxu0
  %v1165 = vadd.f32 %v956, %v1164
  %1166 = vmatmul.f32.gmra.mxu0 %v735
  %v1167 = vpop.f32.mrf.mxu0
  %v1168 = vadd.f32 %v959, %v1167
  %1169 = vmatmul.f32.gmra.mxu0 %v737
  %v1170 = vpop.f32.mrf.mxu0
  %v1171 = vadd.f32 %v962, %v1170
  %1172 = vmatmul.f32.gmra.mxu0 %v739
  %v1173 = vpop.f32.mrf.mxu0
  %v1174 = vadd.f32 %v965, %v1173
  %1175 = vmatmul.f32.gmra.mxu0 %v741
  %v1176 = vpop.f32.mrf.mxu0
  %v1177 = vadd.f32 %v968, %v1176
  %1178 = vmatmul.f32.gmra.mxu0 %v743
  %v1179 = vpop.f32.mrf.mxu0
  %v1180 = vadd.f32 %v971, %v1179
  %1181 = vmatmul.f32.gmra.mxu0 %v745
  %v1182 = vpop.f32.mrf.mxu0
  %v1183 = vadd.f32 %v974, %v1182
  %1184 = vmatmul.f32.gmra.mxu0 %v747
  %v1185 = vpop.f32.mrf.mxu0
  %v1186 = vadd.f32 %v977, %v1185
  %1187 = vmatmul.f32.gmra.mxu0 %v749
  %v1188 = vpop.f32.mrf.mxu0
  %v1189 = vadd.f32 %v980, %v1188
  %1190 = vmatmul.f32.gmra.mxu0 %v751
  %v1191 = vpop.f32.mrf.mxu0
  %v1192 = vadd.f32 %v983, %v1191
  %1193 = vmatmul.f32.gmra.mxu0 %v753
  %v1194 = vpop.f32.mrf.mxu0
  %v1195 = vadd.f32 %v986, %v1194
  %1196 = vmatmul.f32.gmra.mxu0 %v755
  %v1197 = vpop.f32.mrf.mxu0
  %v1198 = vadd.f32 %v989, %v1197
  %1199 = vmatmul.f32.gmra.mxu0 %v757
  %v1200 = vpop.f32.mrf.mxu0
  %v1201 = vadd.f32 %v992, %v1200
  %1202 = vmatmul.f32.gmra.mxu0 %v759
  %v1203 = vpop.f32.mrf.mxu0
  %v1204 = vadd.f32 %v995, %v1203
  %1205 = vmatmul.f32.gmra.mxu0 %v761
  %v1206 = vpop.f32.mrf.mxu0
  %v1207 = vadd.f32 %v998, %v1206
  %1208 = vmatmul.f32.gmra.mxu0 %v763
  %v1209 = vpop.f32.mrf.mxu0
  %v1210 = vadd.f32 %v1001, %v1209
  %1211 = vmatmul.f32.gmra.mxu0 %v765
  %v1212 = vpop.f32.mrf.mxu0
  %v1213 = vadd.f32 %v1004, %v1212
  %1214 = vmatmul.f32.gmra.mxu0 %v767
  %v1215 = vpop.f32.mrf.mxu0
  %v1216 = vadd.f32 %v1007, %v1215
  %1217 = vmatmul.f32.gmra.mxu0 %v769
  %v1218 = vpop.f32.mrf.mxu0
  %v1219 = vadd.f32 %v1010, %v1218
  %1220 = vmatmul.f32.gmra.mxu0 %v771
  %v1221 = vpop.f32.mrf.mxu0
  %v1222 = vadd.f32 %v1013, %v1221
  %1223 = vmatmul.f32.gmra.mxu0 %v773
  %v1224 = vpop.f32.mrf.mxu0
  %v1225 = vadd.f32 %v1016, %v1224
  %1226 = vmatmul.f32.gmra.mxu0 %v775
  %v1227 = vpop.f32.mrf.mxu0
  %v1228 = vadd.f32 %v1019, %v1227
  %1229 = vmatmul.f32.gmra.mxu0 %v777
  %v1230 = vpop.f32.mrf.mxu0
  %v1231 = vadd.f32 %v1022, %v1230
  %1232 = vmatmul.f32.gmra.mxu0 %v779
  %v1233 = vpop.f32.mrf.mxu0
  %v1234 = vadd.f32 %v1025, %v1233
  %1235 = vmatmul.f32.gmra.mxu0 %v781
  %v1236 = vpop.f32.mrf.mxu0
  %v1237 = vadd.f32 %v1028, %v1236
  %1238 = vmatmul.f32.gmra.mxu0 %v783
  %v1239 = vpop.f32.mrf.mxu0
  %v1240 = vadd.f32 %v1031, %v1239
  %1241 = vmatmul.f32.gmra.mxu0 %v785
  %v1242 = vpop.f32.mrf.mxu0
  %v1243 = vadd.f32 %v1034, %v1242
  %1244 = vmatmul.f32.gmra.mxu0 %v787
  %v1245 = vpop.f32.mrf.mxu0
  %v1246 = vadd.f32 %v1037, %v1245
  %1247 = vmatmul.f32.gmra.mxu0 %v789
  %v1248 = vpop.f32.mrf.mxu0
  %v1249 = vadd.f32 %v1040, %v1248
  %1250 = vmatmul.f32.gmra.mxu0 %v791
  %v1251 = vpop.f32.mrf.mxu0
  %v1252 = vadd.f32 %v1043, %v1251
  %1253 = vmatmul.f32.gmra.mxu0 %v793
  %v1254 = vpop.f32.mrf.mxu0
  %v1255 = vadd.f32 %v1046, %v1254
  %1256 = vmatmul.f32.gmra.mxu0 %v795
  %v1257 = vpop.f32.mrf.mxu0
  %v1258 = vadd.f32 %v1049, %v1257
  %1259 = vmatmul.f32.gmra.mxu0 %v797
  %v1260 = vpop.f32.mrf.mxu0
  %v1261 = vadd.f32 %v1052, %v1260
  %1262 = vmatmul.f32.gmra.mxu0 %v799
  %v1263 = vpop.f32.mrf.mxu0
  %v1264 = vadd.f32 %v1055, %v1263
  %1265 = vmatmul.f32.gmra.mxu0 %v801
  %v1266 = vpop.f32.mrf.mxu0
  %v1267 = vadd.f32 %v1058, %v1266
  %1268 = vmatmul.f32.gmra.mxu0 %v803
  %v1269 = vpop.f32.mrf.mxu0
  %v1270 = vadd.f32 %v1061, %v1269
  %1271 = vmatmul.f32.gmra.mxu0 %v805
  %v1272 = vpop.f32.mrf.mxu0
  %v1273 = vadd.f32 %v1064, %v1272
  %1274 = vmatmul.f32.gmra.mxu0 %v807
  %v1275 = vpop.f32.mrf.mxu0
  %v1276 = vadd.f32 %v1067, %v1275
  %1277 = vmatmul.f32.gmra.mxu0 %v809
  %v1278 = vpop.f32.mrf.mxu0
  %v1279 = vadd.f32 %v1070, %v1278
  %1280 = vmatmul.f32.gmra.mxu0 %v811
  %v1281 = vpop.f32.mrf.mxu0
  %v1282 = vadd.f32 %v1073, %v1281
  %1283 = vmatmul.f32.gmra.mxu0 %v813
  %v1284 = vpop.f32.mrf.mxu0
  %v1285 = vadd.f32 %v1076, %v1284
  %1286 = vmatmul.f32.gmra.mxu0 %v815
  %v1287 = vpop.f32.mrf.mxu0
  %v1288 = vadd.f32 %v1079, %v1287
  %1289 = vmatmul.f32.gmra.mxu0 %v817
  %v1290 = vpop.f32.mrf.mxu0
  %v1291 = vadd.f32 %v1082, %v1290
  %1292 = vmatmul.f32.gmra.mxu0 %v819
  %v1293 = vpop.f32.mrf.mxu0
  %v1294 = vadd.f32 %v1085, %v1293
  %1295 = vmatmul.f32.gmra.mxu0 %v821
  %v1296 = vpop.f32.mrf.mxu0
  %v1297 = vadd.f32 %v1088, %v1296
  %1298 = vmatmul.f32.gmra.mxu0 %v823
  %v1299 = vpop.f32.mrf.mxu0
  %v1300 = vadd.f32 %v1091, %v1299
  %1301 = vmatmul.f32.gmra.mxu0 %v825
  %v1302 = vpop.f32.mrf.mxu0
  %v1303 = vadd.f32 %v1094, %v1302
  %1304 = vmatmul.f32.gmra.mxu0 %v827
  %v1305 = vpop.f32.mrf.mxu0
  %v1306 = vadd.f32 %v1097, %v1305
  %1307 = vmatmul.f32.gmra.mxu0 %v829
  %v1308 = vpop.f32.mrf.mxu0
  %v1309 = vadd.f32 %v1100, %v1308
  %1310 = vmatmul.f32.gmra.mxu0 %v831
  %v1311 = vpop.f32.mrf.mxu0
  %v1312 = vadd.f32 %v1103, %v1311
  %1313 = vmatmul.f32.gmra.mxu0 %v833
  %v1314 = vpop.f32.mrf.mxu0
  %v1315 = vadd.f32 %v1106, %v1314
  %1316 = vmatmul.f32.gmra.mxu0 %v835
  %v1317 = vpop.f32.mrf.mxu0
  %v1318 = vadd.f32 %v1109, %v1317
  %1319 = vmatmul.f32.gmra.mxu0 %v837
  %v1320 = vpop.f32.mrf.mxu0
  %v1321 = vadd.f32 %v1112, %v1320
  %1322 = vmatmul.f32.gmra.mxu0 %v839
  %v1323 = vpop.f32.mrf.mxu0
  %v1324 = vadd.f32 %v1115, %v1323
  %1325 = vmatmul.f32.gmra.mxu0 %v841
  %v1326 = vpop.f32.mrf.mxu0
  %v1327 = vadd.f32 %v1118, %v1326
  %1328 = vmatmul.f32.gmra.mxu0 %v843
  %v1329 = vpop.f32.mrf.mxu0
  %v1330 = vadd.f32 %v1121, %v1329
  %1331 = vdwg.mxu0
  %1332 = vmatpush.msra.mxu0 %v875
  %1333 = vmatpush.msra.mxu0 %v873
  %1334 = vmatpush.msra.mxu0 %v871
  %1335 = vmatpush.msra.mxu0 %v869
  %1336 = vmatpush.msra.mxu0 %v867
  %1337 = vmatpush.msra.mxu0 %v865
  %1338 = vmatpush.msra.mxu0 %v863
  %1339 = vmatpush.msra.mxu0 %v861
  %1340 = vmatpush.msra.mxu0 %v859
  %1341 = vmatpush.msra.mxu0 %v857
  %1342 = vmatpush.msra.mxu0 %v855
  %1343 = vmatpush.msra.mxu0 %v853
  %1344 = vmatpush.msra.mxu0 %v851
  %1345 = vmatpush.msra.mxu0 %v849
  %1346 = vmatpush.msra.mxu0 %v847
  %1347 = vmatpush.msra.mxu0 %v845
  %1348 = vmatmul.f32.gmra.mxu0 %v716
  %v1349 = vpop.f32.mrf.mxu0
  %v1350 = vadd.f32 %v911, %v1349
  %1351 = vmatmul.f32.gmra.mxu0 %v718
  %v1352 = vpop.f32.mrf.mxu0
  %v1353 = vadd.f32 %v911, %v1352
  %1354 = vmatmul.f32.gmra.mxu0 %v720
  %v1355 = vpop.f32.mrf.mxu0
  %v1356 = vadd.f32 %v911, %v1355
  %1357 = vmatmul.f32.gmra.mxu0 %v722
  %v1358 = vpop.f32.mrf.mxu0
  %v1359 = vadd.f32 %v911, %v1358
  %1360 = vmatmul.f32.gmra.mxu0 %v724
  %v1361 = vpop.f32.mrf.mxu0
  %v1362 = vadd.f32 %v911, %v1361
  %1363 = vmatmul.f32.gmra.mxu0 %v726
  %v1364 = vpop.f32.mrf.mxu0
  %v1365 = vadd.f32 %v911, %v1364
  %1366 = vmatmul.f32.gmra.mxu0 %v728
  %v1367 = vpop.f32.mrf.mxu0
  %v1368 = vadd.f32 %v911, %v1367
  %1369 = vmatmul.f32.gmra.mxu0 %v730
  %v1370 = vpop.f32.mrf.mxu0
  %v1371 = vadd.f32 %v911, %v1370
  %1372 = vmatmul.f32.gmra.mxu0 %v732
  %v1373 = vpop.f32.mrf.mxu0
  %v1374 = vadd.f32 %v911, %v1373
  %1375 = vmatmul.f32.gmra.mxu0 %v734
  %v1376 = vpop.f32.mrf.mxu0
  %v1377 = vadd.f32 %v911, %v1376
  %1378 = vmatmul.f32.gmra.mxu0 %v736
  %v1379 = vpop.f32.mrf.mxu0
  %v1380 = vadd.f32 %v911, %v1379
  %1381 = vmatmul.f32.gmra.mxu0 %v738
  %v1382 = vpop.f32.mrf.mxu0
  %v1383 = vadd.f32 %v911, %v1382
  %1384 = vmatmul.f32.gmra.mxu0 %v740
  %v1385 = vpop.f32.mrf.mxu0
  %v1386 = vadd.f32 %v911, %v1385
  %1387 = vmatmul.f32.gmra.mxu0 %v742
  %v1388 = vpop.f32.mrf.mxu0
  %v1389 = vadd.f32 %v911, %v1388
  %1390 = vmatmul.f32.gmra.mxu0 %v744
  %v1391 = vpop.f32.mrf.mxu0
  %v1392 = vadd.f32 %v911, %v1391
  %1393 = vmatmul.f32.gmra.mxu0 %v746
  %v1394 = vpop.f32.mrf.mxu0
  %v1395 = vadd.f32 %v911, %v1394
  %1396 = vmatmul.f32.gmra.mxu0 %v748
  %v1397 = vpop.f32.mrf.mxu0
  %v1398 = vadd.f32 %v911, %v1397
  %1399 = vmatmul.f32.gmra.mxu0 %v750
  %v1400 = vpop.f32.mrf.mxu0
  %v1401 = vadd.f32 %v911, %v1400
  %1402 = vmatmul.f32.gmra.mxu0 %v752
  %v1403 = vpop.f32.mrf.mxu0
  %v1404 = vadd.f32 %v911, %v1403
  %1405 = vmatmul.f32.gmra.mxu0 %v754
  %v1406 = vpop.f32.mrf.mxu0
  %v1407 = vadd.f32 %v911, %v1406
  %1408 = vmatmul.f32.gmra.mxu0 %v756
  %v1409 = vpop.f32.mrf.mxu0
  %v1410 = vadd.f32 %v911, %v1409
  %1411 = vmatmul.f32.gmra.mxu0 %v758
  %v1412 = vpop.f32.mrf.mxu0
  %v1413 = vadd.f32 %v911, %v1412
  %1414 = vmatmul.f32.gmra.mxu0 %v760
  %v1415 = vpop.f32.mrf.mxu0
  %v1416 = vadd.f32 %v911, %v1415
  %1417 = vmatmul.f32.gmra.mxu0 %v762
  %v1418 = vpop.f32.mrf.mxu0
  %v1419 = vadd.f32 %v911, %v1418
  %1420 = vmatmul.f32.gmra.mxu0 %v764
  %v1421 = vpop.f32.mrf.mxu0
  %v1422 = vadd.f32 %v911, %v1421
  %1423 = vmatmul.f32.gmra.mxu0 %v766
  %v1424 = vpop.f32.mrf.mxu0
  %v1425 = vadd.f32 %v911, %v1424
  %1426 = vmatmul.f32.gmra.mxu0 %v768
  %v1427 = vpop.f32.mrf.mxu0
  %v1428 = vadd.f32 %v911, %v1427
  %1429 = vmatmul.f32.gmra.mxu0 %v770
  %v1430 = vpop.f32.mrf.mxu0
  %v1431 = vadd.f32 %v911, %v1430
  %1432 = vmatmul.f32.gmra.mxu0 %v772
  %v1433 = vpop.f32.mrf.mxu0
  %v1434 = vadd.f32 %v911, %v1433
  %1435 = vmatmul.f32.gmra.mxu0 %v774
  %v1436 = vpop.f32.mrf.mxu0
  %v1437 = vadd.f32 %v911, %v1436
  %1438 = vmatmul.f32.gmra.mxu0 %v776
  %v1439 = vpop.f32.mrf.mxu0
  %v1440 = vadd.f32 %v911, %v1439
  %1441 = vmatmul.f32.gmra.mxu0 %v778
  %v1442 = vpop.f32.mrf.mxu0
  %v1443 = vadd.f32 %v911, %v1442
  %1444 = vmatmul.f32.gmra.mxu0 %v780
  %v1445 = vpop.f32.mrf.mxu0
  %v1446 = vadd.f32 %v911, %v1445
  %1447 = vmatmul.f32.gmra.mxu0 %v782
  %v1448 = vpop.f32.mrf.mxu0
  %v1449 = vadd.f32 %v911, %v1448
  %1450 = vmatmul.f32.gmra.mxu0 %v784
  %v1451 = vpop.f32.mrf.mxu0
  %v1452 = vadd.f32 %v911, %v1451
  %1453 = vmatmul.f32.gmra.mxu0 %v786
  %v1454 = vpop.f32.mrf.mxu0
  %v1455 = vadd.f32 %v911, %v1454
  %1456 = vmatmul.f32.gmra.mxu0 %v788
  %v1457 = vpop.f32.mrf.mxu0
  %v1458 = vadd.f32 %v911, %v1457
  %1459 = vmatmul.f32.gmra.mxu0 %v790
  %v1460 = vpop.f32.mrf.mxu0
  %v1461 = vadd.f32 %v911, %v1460
  %1462 = vmatmul.f32.gmra.mxu0 %v792
  %v1463 = vpop.f32.mrf.mxu0
  %v1464 = vadd.f32 %v911, %v1463
  %1465 = vmatmul.f32.gmra.mxu0 %v794
  %v1466 = vpop.f32.mrf.mxu0
  %v1467 = vadd.f32 %v911, %v1466
  %1468 = vmatmul.f32.gmra.mxu0 %v796
  %v1469 = vpop.f32.mrf.mxu0
  %v1470 = vadd.f32 %v911, %v1469
  %1471 = vmatmul.f32.gmra.mxu0 %v798
  %v1472 = vpop.f32.mrf.mxu0
  %v1473 = vadd.f32 %v911, %v1472
  %1474 = vmatmul.f32.gmra.mxu0 %v800
  %v1475 = vpop.f32.mrf.mxu0
  %v1476 = vadd.f32 %v911, %v1475
  %1477 = vmatmul.f32.gmra.mxu0 %v802
  %v1478 = vpop.f32.mrf.mxu0
  %v1479 = vadd.f32 %v911, %v1478
  %1480 = vmatmul.f32.gmra.mxu0 %v804
  %v1481 = vpop.f32.mrf.mxu0
  %v1482 = vadd.f32 %v911, %v1481
  %1483 = vmatmul.f32.gmra.mxu0 %v806
  %v1484 = vpop.f32.mrf.mxu0
  %v1485 = vadd.f32 %v911, %v1484
  %1486 = vmatmul.f32.gmra.mxu0 %v808
  %v1487 = vpop.f32.mrf.mxu0
  %v1488 = vadd.f32 %v911, %v1487
  %1489 = vmatmul.f32.gmra.mxu0 %v810
  %v1490 = vpop.f32.mrf.mxu0
  %v1491 = vadd.f32 %v911, %v1490
  %1492 = vmatmul.f32.gmra.mxu0 %v812
  %v1493 = vpop.f32.mrf.mxu0
  %v1494 = vadd.f32 %v911, %v1493
  %1495 = vmatmul.f32.gmra.mxu0 %v814
  %v1496 = vpop.f32.mrf.mxu0
  %v1497 = vadd.f32 %v911, %v1496
  %1498 = vmatmul.f32.gmra.mxu0 %v816
  %v1499 = vpop.f32.mrf.mxu0
  %v1500 = vadd.f32 %v911, %v1499
  %1501 = vmatmul.f32.gmra.mxu0 %v818
  %v1502 = vpop.f32.mrf.mxu0
  %v1503 = vadd.f32 %v911, %v1502
  %1504 = vmatmul.f32.gmra.mxu0 %v820
  %v1505 = vpop.f32.mrf.mxu0
  %v1506 = vadd.f32 %v911, %v1505
  %1507 = vmatmul.f32.gmra.mxu0 %v822
  %v1508 = vpop.f32.mrf.mxu0
  %v1509 = vadd.f32 %v911, %v1508
  %1510 = vmatmul.f32.gmra.mxu0 %v824
  %v1511 = vpop.f32.mrf.mxu0
  %v1512 = vadd.f32 %v911, %v1511
  %1513 = vmatmul.f32.gmra.mxu0 %v826
  %v1514 = vpop.f32.mrf.mxu0
  %v1515 = vadd.f32 %v911, %v1514
  %1516 = vmatmul.f32.gmra.mxu0 %v828
  %v1517 = vpop.f32.mrf.mxu0
  %v1518 = vadd.f32 %v911, %v1517
  %1519 = vmatmul.f32.gmra.mxu0 %v830
  %v1520 = vpop.f32.mrf.mxu0
  %v1521 = vadd.f32 %v911, %v1520
  %1522 = vmatmul.f32.gmra.mxu0 %v832
  %v1523 = vpop.f32.mrf.mxu0
  %v1524 = vadd.f32 %v911, %v1523
  %1525 = vmatmul.f32.gmra.mxu0 %v834
  %v1526 = vpop.f32.mrf.mxu0
  %v1527 = vadd.f32 %v911, %v1526
  %1528 = vmatmul.f32.gmra.mxu0 %v836
  %v1529 = vpop.f32.mrf.mxu0
  %v1530 = vadd.f32 %v911, %v1529
  %1531 = vmatmul.f32.gmra.mxu0 %v838
  %v1532 = vpop.f32.mrf.mxu0
  %v1533 = vadd.f32 %v911, %v1532
  %1534 = vmatmul.f32.gmra.mxu0 %v840
  %v1535 = vpop.f32.mrf.mxu0
  %v1536 = vadd.f32 %v911, %v1535
  %1537 = vmatmul.f32.gmra.mxu0 %v842
  %v1538 = vpop.f32.mrf.mxu0
  %v1539 = vadd.f32 %v911, %v1538
  %1540 = vdwg.mxu0
  %1541 = vmatpush.msra.mxu0 %v907
  %1542 = vmatpush.msra.mxu0 %v905
  %1543 = vmatpush.msra.mxu0 %v903
  %1544 = vmatpush.msra.mxu0 %v901
  %1545 = vmatpush.msra.mxu0 %v899
  %1546 = vmatpush.msra.mxu0 %v897
  %1547 = vmatpush.msra.mxu0 %v895
  %1548 = vmatpush.msra.mxu0 %v893
  %1549 = vmatpush.msra.mxu0 %v891
  %1550 = vmatpush.msra.mxu0 %v889
  %1551 = vmatpush.msra.mxu0 %v887
  %1552 = vmatpush.msra.mxu0 %v885
  %1553 = vmatpush.msra.mxu0 %v883
  %1554 = vmatpush.msra.mxu0 %v881
  %1555 = vmatpush.msra.mxu0 %v879
  %1556 = vmatpush.msra.mxu0 %v877
  %1557 = vmatmul.f32.gmra.mxu0 %v717
  %v1558 = vpop.f32.mrf.mxu0
  %v1559 = vadd.f32 %v1350, %v1558
  %1560 = vmatmul.f32.gmra.mxu0 %v719
  %v1561 = vpop.f32.mrf.mxu0
  %v1562 = vadd.f32 %v1353, %v1561
  %1563 = vmatmul.f32.gmra.mxu0 %v721
  %v1564 = vpop.f32.mrf.mxu0
  %v1565 = vadd.f32 %v1356, %v1564
  %1566 = vmatmul.f32.gmra.mxu0 %v723
  %v1567 = vpop.f32.mrf.mxu0
  %v1568 = vadd.f32 %v1359, %v1567
  %1569 = vmatmul.f32.gmra.mxu0 %v725
  %v1570 = vpop.f32.mrf.mxu0
  %v1571 = vadd.f32 %v1362, %v1570
  %1572 = vmatmul.f32.gmra.mxu0 %v727
  %v1573 = vpop.f32.mrf.mxu0
  %v1574 = vadd.f32 %v1365, %v1573
  %1575 = vmatmul.f32.gmra.mxu0 %v729
  %v1576 = vpop.f32.mrf.mxu0
  %v1577 = vadd.f32 %v1368, %v1576
  %1578 = vmatmul.f32.gmra.mxu0 %v731
  %v1579 = vpop.f32.mrf.mxu0
  %v1580 = vadd.f32 %v1371, %v1579
  %1581 = vmatmul.f32.gmra.mxu0 %v733
  %v1582 = vpop.f32.mrf.mxu0
  %v1583 = vadd.f32 %v1374, %v1582
  %1584 = vmatmul.f32.gmra.mxu0 %v735
  %v1585 = vpop.f32.mrf.mxu0
  %v1586 = vadd.f32 %v1377, %v1585
  %1587 = vmatmul.f32.gmra.mxu0 %v737
  %v1588 = vpop.f32.mrf.mxu0
  %v1589 = vadd.f32 %v1380, %v1588
  %1590 = vmatmul.f32.gmra.mxu0 %v739
  %v1591 = vpop.f32.mrf.mxu0
  %v1592 = vadd.f32 %v1383, %v1591
  %1593 = vmatmul.f32.gmra.mxu0 %v741
  %v1594 = vpop.f32.mrf.mxu0
  %v1595 = vadd.f32 %v1386, %v1594
  %1596 = vmatmul.f32.gmra.mxu0 %v743
  %v1597 = vpop.f32.mrf.mxu0
  %v1598 = vadd.f32 %v1389, %v1597
  %1599 = vmatmul.f32.gmra.mxu0 %v745
  %v1600 = vpop.f32.mrf.mxu0
  %v1601 = vadd.f32 %v1392, %v1600
  %1602 = vmatmul.f32.gmra.mxu0 %v747
  %v1603 = vpop.f32.mrf.mxu0
  %v1604 = vadd.f32 %v1395, %v1603
  %1605 = vmatmul.f32.gmra.mxu0 %v749
  %v1606 = vpop.f32.mrf.mxu0
  %v1607 = vadd.f32 %v1398, %v1606
  %1608 = vmatmul.f32.gmra.mxu0 %v751
  %v1609 = vpop.f32.mrf.mxu0
  %v1610 = vadd.f32 %v1401, %v1609
  %1611 = vmatmul.f32.gmra.mxu0 %v753
  %v1612 = vpop.f32.mrf.mxu0
  %v1613 = vadd.f32 %v1404, %v1612
  %1614 = vmatmul.f32.gmra.mxu0 %v755
  %v1615 = vpop.f32.mrf.mxu0
  %v1616 = vadd.f32 %v1407, %v1615
  %1617 = vmatmul.f32.gmra.mxu0 %v757
  %v1618 = vpop.f32.mrf.mxu0
  %v1619 = vadd.f32 %v1410, %v1618
  %1620 = vmatmul.f32.gmra.mxu0 %v759
  %v1621 = vpop.f32.mrf.mxu0
  %v1622 = vadd.f32 %v1413, %v1621
  %1623 = vmatmul.f32.gmra.mxu0 %v761
  %v1624 = vpop.f32.mrf.mxu0
  %v1625 = vadd.f32 %v1416, %v1624
  %1626 = vmatmul.f32.gmra.mxu0 %v763
  %v1627 = vpop.f32.mrf.mxu0
  %v1628 = vadd.f32 %v1419, %v1627
  %1629 = vmatmul.f32.gmra.mxu0 %v765
  %v1630 = vpop.f32.mrf.mxu0
  %v1631 = vadd.f32 %v1422, %v1630
  %1632 = vmatmul.f32.gmra.mxu0 %v767
  %v1633 = vpop.f32.mrf.mxu0
  %v1634 = vadd.f32 %v1425, %v1633
  %1635 = vmatmul.f32.gmra.mxu0 %v769
  %v1636 = vpop.f32.mrf.mxu0
  %v1637 = vadd.f32 %v1428, %v1636
  %1638 = vmatmul.f32.gmra.mxu0 %v771
  %v1639 = vpop.f32.mrf.mxu0
  %v1640 = vadd.f32 %v1431, %v1639
  %1641 = vmatmul.f32.gmra.mxu0 %v773
  %v1642 = vpop.f32.mrf.mxu0
  %v1643 = vadd.f32 %v1434, %v1642
  %1644 = vmatmul.f32.gmra.mxu0 %v775
  %v1645 = vpop.f32.mrf.mxu0
  %v1646 = vadd.f32 %v1437, %v1645
  %1647 = vmatmul.f32.gmra.mxu0 %v777
  %v1648 = vpop.f32.mrf.mxu0
  %v1649 = vadd.f32 %v1440, %v1648
  %1650 = vmatmul.f32.gmra.mxu0 %v779
  %v1651 = vpop.f32.mrf.mxu0
  %v1652 = vadd.f32 %v1443, %v1651
  %1653 = vmatmul.f32.gmra.mxu0 %v781
  %v1654 = vpop.f32.mrf.mxu0
  %v1655 = vadd.f32 %v1446, %v1654
  %1656 = vmatmul.f32.gmra.mxu0 %v783
  %v1657 = vpop.f32.mrf.mxu0
  %v1658 = vadd.f32 %v1449, %v1657
  %1659 = vmatmul.f32.gmra.mxu0 %v785
  %v1660 = vpop.f32.mrf.mxu0
  %v1661 = vadd.f32 %v1452, %v1660
  %1662 = vmatmul.f32.gmra.mxu0 %v787
  %v1663 = vpop.f32.mrf.mxu0
  %v1664 = vadd.f32 %v1455, %v1663
  %1665 = vmatmul.f32.gmra.mxu0 %v789
  %v1666 = vpop.f32.mrf.mxu0
  %v1667 = vadd.f32 %v1458, %v1666
  %1668 = vmatmul.f32.gmra.mxu0 %v791
  %v1669 = vpop.f32.mrf.mxu0
  %v1670 = vadd.f32 %v1461, %v1669
  %1671 = vmatmul.f32.gmra.mxu0 %v793
  %v1672 = vpop.f32.mrf.mxu0
  %v1673 = vadd.f32 %v1464, %v1672
  %1674 = vmatmul.f32.gmra.mxu0 %v795
  %v1675 = vpop.f32.mrf.mxu0
  %v1676 = vadd.f32 %v1467, %v1675
  %1677 = vmatmul.f32.gmra.mxu0 %v797
  %v1678 = vpop.f32.mrf.mxu0
  %v1679 = vadd.f32 %v1470, %v1678
  %1680 = vmatmul.f32.gmra.mxu0 %v799
  %v1681 = vpop.f32.mrf.mxu0
  %v1682 = vadd.f32 %v1473, %v1681
  %1683 = vmatmul.f32.gmra.mxu0 %v801
  %v1684 = vpop.f32.mrf.mxu0
  %v1685 = vadd.f32 %v1476, %v1684
  %1686 = vmatmul.f32.gmra.mxu0 %v803
  %v1687 = vpop.f32.mrf.mxu0
  %v1688 = vadd.f32 %v1479, %v1687
  %1689 = vmatmul.f32.gmra.mxu0 %v805
  %v1690 = vpop.f32.mrf.mxu0
  %v1691 = vadd.f32 %v1482, %v1690
  %1692 = vmatmul.f32.gmra.mxu0 %v807
  %v1693 = vpop.f32.mrf.mxu0
  %v1694 = vadd.f32 %v1485, %v1693
  %1695 = vmatmul.f32.gmra.mxu0 %v809
  %v1696 = vpop.f32.mrf.mxu0
  %v1697 = vadd.f32 %v1488, %v1696
  %1698 = vmatmul.f32.gmra.mxu0 %v811
  %v1699 = vpop.f32.mrf.mxu0
  %v1700 = vadd.f32 %v1491, %v1699
  %1701 = vmatmul.f32.gmra.mxu0 %v813
  %v1702 = vpop.f32.mrf.mxu0
  %v1703 = vadd.f32 %v1494, %v1702
  %1704 = vmatmul.f32.gmra.mxu0 %v815
  %v1705 = vpop.f32.mrf.mxu0
  %v1706 = vadd.f32 %v1497, %v1705
  %1707 = vmatmul.f32.gmra.mxu0 %v817
  %v1708 = vpop.f32.mrf.mxu0
  %v1709 = vadd.f32 %v1500, %v1708
  %1710 = vmatmul.f32.gmra.mxu0 %v819
  %v1711 = vpop.f32.mrf.mxu0
  %v1712 = vadd.f32 %v1503, %v1711
  %1713 = vmatmul.f32.gmra.mxu0 %v821
  %v1714 = vpop.f32.mrf.mxu0
  %v1715 = vadd.f32 %v1506, %v1714
  %1716 = vmatmul.f32.gmra.mxu0 %v823
  %v1717 = vpop.f32.mrf.mxu0
  %v1718 = vadd.f32 %v1509, %v1717
  %1719 = vmatmul.f32.gmra.mxu0 %v825
  %v1720 = vpop.f32.mrf.mxu0
  %v1721 = vadd.f32 %v1512, %v1720
  %1722 = vmatmul.f32.gmra.mxu0 %v827
  %v1723 = vpop.f32.mrf.mxu0
  %v1724 = vadd.f32 %v1515, %v1723
  %1725 = vmatmul.f32.gmra.mxu0 %v829
  %v1726 = vpop.f32.mrf.mxu0
  %v1727 = vadd.f32 %v1518, %v1726
  %1728 = vmatmul.f32.gmra.mxu0 %v831
  %v1729 = vpop.f32.mrf.mxu0
  %v1730 = vadd.f32 %v1521, %v1729
  %1731 = vmatmul.f32.gmra.mxu0 %v833
  %v1732 = vpop.f32.mrf.mxu0
  %v1733 = vadd.f32 %v1524, %v1732
  %1734 = vmatmul.f32.gmra.mxu0 %v835
  %v1735 = vpop.f32.mrf.mxu0
  %v1736 = vadd.f32 %v1527, %v1735
  %1737 = vmatmul.f32.gmra.mxu0 %v837
  %v1738 = vpop.f32.mrf.mxu0
  %v1739 = vadd.f32 %v1530, %v1738
  %1740 = vmatmul.f32.gmra.mxu0 %v839
  %v1741 = vpop.f32.mrf.mxu0
  %v1742 = vadd.f32 %v1533, %v1741
  %1743 = vmatmul.f32.gmra.mxu0 %v841
  %v1744 = vpop.f32.mrf.mxu0
  %v1745 = vadd.f32 %v1536, %v1744
  %1746 = vmatmul.f32.gmra.mxu0 %v843
  %v1747 = vpop.f32.mrf.mxu0
  %v1748 = vadd.f32 %v1539, %v1747
  %1749 = vdwg.mxu0
  %v1750 = vmax.f32 %v1141, 0.0
  %v1751 = vmax.f32 %v1559, 0.0
  %v1752 = vmax.f32 %v1144, 0.0
  %v1753 = vmax.f32 %v1562, 0.0
  %v1754 = vmax.f32 %v1147, 0.0
  %v1755 = vmax.f32 %v1565, 0.0
  %v1756 = vmax.f32 %v1150, 0.0
  %v1757 = vmax.f32 %v1568, 0.0
  %v1758 = vmax.f32 %v1153, 0.0
  %v1759 = vmax.f32 %v1571, 0.0
  %v1760 = vmax.f32 %v1156, 0.0
  %v1761 = vmax.f32 %v1574, 0.0
  %v1762 = vmax.f32 %v1159, 0.0
  %v1763 = vmax.f32 %v1577, 0.0
  %v1764 = vmax.f32 %v1162, 0.0
  %v1765 = vmax.f32 %v1580, 0.0
  %v1766 = vmax.f32 %v1165, 0.0
  %v1767 = vmax.f32 %v1583, 0.0
  %v1768 = vmax.f32 %v1168, 0.0
  %v1769 = vmax.f32 %v1586, 0.0
  %v1770 = vmax.f32 %v1171, 0.0
  %v1771 = vmax.f32 %v1589, 0.0
  %v1772 = vmax.f32 %v1174, 0.0
  %v1773 = vmax.f32 %v1592, 0.0
  %v1774 = vmax.f32 %v1177, 0.0
  %v1775 = vmax.f32 %v1595, 0.0
  %v1776 = vmax.f32 %v1180, 0.0
  %v1777 = vmax.f32 %v1598, 0.0
  %v1778 = vmax.f32 %v1183, 0.0
  %v1779 = vmax.f32 %v1601, 0.0
  %v1780 = vmax.f32 %v1186, 0.0
  %v1781 = vmax.f32 %v1604, 0.0
  %v1782 = vmax.f32 %v1189, 0.0
  %v1783 = vmax.f32 %v1607, 0.0
  %v1784 = vmax.f32 %v1192, 0.0
  %v1785 = vmax.f32 %v1610, 0.0
  %v1786 = vmax.f32 %v1195, 0.0
  %v1787 = vmax.f32 %v1613, 0.0
  %v1788 = vmax.f32 %v1198, 0.0
  %v1789 = vmax.f32 %v1616, 0.0
  %v1790 = vmax.f32 %v1201, 0.0
  %v1791 = vmax.f32 %v1619, 0.0
  %v1792 = vmax.f32 %v1204, 0.0
  %v1793 = vmax.f32 %v1622, 0.0
  %v1794 = vmax.f32 %v1207, 0.0
  %v1795 = vmax.f32 %v1625, 0.0
  %v1796 = vmax.f32 %v1210, 0.0
  %v1797 = vmax.f32 %v1628, 0.0
  %v1798 = vmax.f32 %v1213, 0.0
  %v1799 = vmax.f32 %v1631, 0.0
  %v1800 = vmax.f32 %v1216, 0.0
  %v1801 = vmax.f32 %v1634, 0.0
  %v1802 = vmax.f32 %v1219, 0.0
  %v1803 = vmax.f32 %v1637, 0.0
  %v1804 = vmax.f32 %v1222, 0.0
  %v1805 = vmax.f32 %v1640, 0.0
  %v1806 = vmax.f32 %v1225, 0.0
  %v1807 = vmax.f32 %v1643, 0.0
  %v1808 = vmax.f32 %v1228, 0.0
  %v1809 = vmax.f32 %v1646, 0.0
  %v1810 = vmax.f32 %v1231, 0.0
  %v1811 = vmax.f32 %v1649, 0.0
  %v1812 = vmax.f32 %v1234, 0.0
  %v1813 = vmax.f32 %v1652, 0.0
  %v1814 = vmax.f32 %v1237, 0.0
  %v1815 = vmax.f32 %v1655, 0.0
  %v1816 = vmax.f32 %v1240, 0.0
  %v1817 = vmax.f32 %v1658, 0.0
  %v1818 = vmax.f32 %v1243, 0.0
  %v1819 = vmax.f32 %v1661, 0.0
  %v1820 = vmax.f32 %v1246, 0.0
  %v1821 = vmax.f32 %v1664, 0.0
  %v1822 = vmax.f32 %v1249, 0.0
  %v1823 = vmax.f32 %v1667, 0.0
  %v1824 = vmax.f32 %v1252, 0.0
  %v1825 = vmax.f32 %v1670, 0.0
  %v1826 = vmax.f32 %v1255, 0.0
  %v1827 = vmax.f32 %v1673, 0.0
  %v1828 = vmax.f32 %v1258, 0.0
  %v1829 = vmax.f32 %v1676, 0.0
  %v1830 = vmax.f32 %v1261, 0.0
  %v1831 = vmax.f32 %v1679, 0.0
  %v1832 = vmax.f32 %v1264, 0.0
  %v1833 = vmax.f32 %v1682, 0.0
  %v1834 = vmax.f32 %v1267, 0.0
  %v1835 = vmax.f32 %v1685, 0.0
  %v1836 = vmax.f32 %v1270, 0.0
  %v1837 = vmax.f32 %v1688, 0.0
  %v1838 = vmax.f32 %v1273, 0.0
  %v1839 = vmax.f32 %v1691, 0.0
  %v1840 = vmax.f32 %v1276, 0.0
  %v1841 = vmax.f32 %v1694, 0.0
  %v1842 = vmax.f32 %v1279, 0.0
  %v1843 = vmax.f32 %v1697, 0.0
  %v1844 = vmax.f32 %v1282, 0.0
  %v1845 = vmax.f32 %v1700, 0.0
  %v1846 = vmax.f32 %v1285, 0.0
  %v1847 = vmax.f32 %v1703, 0.0
  %v1848 = vmax.f32 %v1288, 0.0
  %v1849 = vmax.f32 %v1706, 0.0
  %v1850 = vmax.f32 %v1291, 0.0
  %v1851 = vmax.f32 %v1709, 0.0
  %v1852 = vmax.f32 %v1294, 0.0
  %v1853 = vmax.f32 %v1712, 0.0
  %v1854 = vmax.f32 %v1297, 0.0
  %v1855 = vmax.f32 %v1715, 0.0
  %v1856 = vmax.f32 %v1300, 0.0
  %v1857 = vmax.f32 %v1718, 0.0
  %v1858 = vmax.f32 %v1303, 0.0
  %v1859 = vmax.f32 %v1721, 0.0
  %v1860 = vmax.f32 %v1306, 0.0
  %v1861 = vmax.f32 %v1724, 0.0
  %v1862 = vmax.f32 %v1309, 0.0
  %v1863 = vmax.f32 %v1727, 0.0
  %v1864 = vmax.f32 %v1312, 0.0
  %v1865 = vmax.f32 %v1730, 0.0
  %v1866 = vmax.f32 %v1315, 0.0
  %v1867 = vmax.f32 %v1733, 0.0
  %v1868 = vmax.f32 %v1318, 0.0
  %v1869 = vmax.f32 %v1736, 0.0
  %v1870 = vmax.f32 %v1321, 0.0
  %v1871 = vmax.f32 %v1739, 0.0
  %v1872 = vmax.f32 %v1324, 0.0
  %v1873 = vmax.f32 %v1742, 0.0
  %v1874 = vmax.f32 %v1327, 0.0
  %v1875 = vmax.f32 %v1745, 0.0
  %v1876 = vmax.f32 %v1330, 0.0
  %v1877 = vmax.f32 %v1748, 0.0
  %v1878 = vld [vmem:[%s5] sm:$0xff]
  %v1879 = vld [vmem:[%s5 + $0x8] sm:$0xff]
  %v1880 = vld [vmem:[%s5 + $0x10] sm:$0xff]
  %v1881 = vld [vmem:[%s5 + $0x18] sm:$0xff]
  %v1882 = vld [vmem:[%s5 + $0x20] sm:$0xff]
  %v1883 = vld [vmem:[%s5 + $0x28] sm:$0xff]
  %v1884 = vld [vmem:[%s5 + $0x30] sm:$0xff]
  %v1885 = vld [vmem:[%s5 + $0x38] sm:$0xff]
  %v1886 = vld [vmem:[%s5 + $0x40] sm:$0xff]
  %v1887 = vld [vmem:[%s5 + $0x48] sm:$0xff]
  %v1888 = vld [vmem:[%s5 + $0x50] sm:$0xff]
  %v1889 = vld [vmem:[%s5 + $0x58] sm:$0xff]
  %v1890 = vld [vmem:[%s5 + $0x60] sm:$0xff]
  %v1891 = vld [vmem:[%s5 + $0x68] sm:$0xff]
  %v1892 = vld [vmem:[%s5 + $0x70] sm:$0xff]
  %v1893 = vld [vmem:[%s5 + $0x78] sm:$0xff]
  %v1894 = vld [vmem:[%s5 + $0x80] sm:$0xff]
  %v1895 = vld [vmem:[%s5 + $0x88] sm:$0xff]
  %v1896 = vld [vmem:[%s5 + $0x90] sm:$0xff]
  %v1897 = vld [vmem:[%s5 + $0x98] sm:$0xff]
  %v1898 = vld [vmem:[%s5 + $0xa0] sm:$0xff]
  %v1899 = vld [vmem:[%s5 + $0xa8] sm:$0xff]
  %v1900 = vld [vmem:[%s5 + $0xb0] sm:$0xff]
  %v1901 = vld [vmem:[%s5 + $0xb8] sm:$0xff]
  %v1902 = vld [vmem:[%s5 + $0xc0] sm:$0xff]
  %v1903 = vld [vmem:[%s5 + $0xc8] sm:$0xff]
  %v1904 = vld [vmem:[%s5 + $0xd0] sm:$0xff]
  %v1905 = vld [vmem:[%s5 + $0xd8] sm:$0xff]
  %v1906 = vld [vmem:[%s5 + $0xe0] sm:$0xff]
  %v1907 = vld [vmem:[%s5 + $0xe8] sm:$0xff]
  %v1908 = vld [vmem:[%s5 + $0xf0] sm:$0xff]
  %v1909 = vld [vmem:[%s5 + $0xf8] sm:$0xff]
  %s1910 = sld [smem:[#allocation2]]
  %v1911 = vstv %s1910
  %1912 = vmatpush.msra.mxu0 %v1893
  %1913 = vmatpush.msra.mxu0 %v1892
  %1914 = vmatpush.msra.mxu0 %v1891
  %1915 = vmatpush.msra.mxu0 %v1890
  %1916 = vmatpush.msra.mxu0 %v1889
  %1917 = vmatpush.msra.mxu0 %v1888
  %1918 = vmatpush.msra.mxu0 %v1887
  %1919 = vmatpush.msra.mxu0 %v1886
  %1920 = vmatpush.msra.mxu0 %v1885
  %1921 = vmatpush.msra.mxu0 %v1884
  %1922 = vmatpush.msra.mxu0 %v1883
  %1923 = vmatpush.msra.mxu0 %v1882
  %1924 = vmatpush.msra.mxu0 %v1881
  %1925 = vmatpush.msra.mxu0 %v1880
  %1926 = vmatpush.msra.mxu0 %v1879
  %1927 = vmatpush.msra.mxu0 %v1878
  %1928 = vmatmul.f32.gmra.mxu0 %v1750
  %v1929 = vpop.f32.mrf.mxu0
  %v1930 = vadd.f32 %v1911, %v1929
  %1931 = vmatmul.f32.gmra.mxu0 %v1752
  %v1932 = vpop.f32.mrf.mxu0
  %v1933 = vadd.f32 %v1911, %v1932
  %1934 = vmatmul.f32.gmra.mxu0 %v1754
  %v1935 = vpop.f32.mrf.mxu0
  %v1936 = vadd.f32 %v1911, %v1935
  %1937 = vmatmul.f32.gmra.mxu0 %v1756
  %v1938 = vpop.f32.mrf.mxu0
  %v1939 = vadd.f32 %v1911, %v1938
  %1940 = vmatmul.f32.gmra.mxu0 %v1758
  %v1941 = vpop.f32.mrf.mxu0
  %v1942 = vadd.f32 %v1911, %v1941
  %1943 = vmatmul.f32.gmra.mxu0 %v1760
  %v1944 = vpop.f32.mrf.mxu0
  %v1945 = vadd.f32 %v1911, %v1944
  %1946 = vmatmul.f32.gmra.mxu0 %v1762
  %v1947 = vpop.f32.mrf.mxu0
  %v1948 = vadd.f32 %v1911, %v1947
  %1949 = vmatmul.f32.gmra.mxu0 %v1764
  %v1950 = vpop.f32.mrf.mxu0
  %v1951 = vadd.f32 %v1911, %v1950
  %1952 = vmatmul.f32.gmra.mxu0 %v1766
  %v1953 = vpop.f32.mrf.mxu0
  %v1954 = vadd.f32 %v1911, %v1953
  %1955 = vmatmul.f32.gmra.mxu0 %v1768
  %v1956 = vpop.f32.mrf.mxu0
  %v1957 = vadd.f32 %v1911, %v1956
  %1958 = vmatmul.f32.gmra.mxu0 %v1770
  %v1959 = vpop.f32.mrf.mxu0
  %v1960 = vadd.f32 %v1911, %v1959
  %1961 = vmatmul.f32.gmra.mxu0 %v1772
  %v1962 = vpop.f32.mrf.mxu0
  %v1963 = vadd.f32 %v1911, %v1962
  %1964 = vmatmul.f32.gmra.mxu0 %v1774
  %v1965 = vpop.f32.mrf.mxu0
  %v1966 = vadd.f32 %v1911, %v1965
  %1967 = vmatmul.f32.gmra.mxu0 %v1776
  %v1968 = vpop.f32.mrf.mxu0
  %v1969 = vadd.f32 %v1911, %v1968
  %1970 = vmatmul.f32.gmra.mxu0 %v1778
  %v1971 = vpop.f32.mrf.mxu0
  %v1972 = vadd.f32 %v1911, %v1971
  %1973 = vmatmul.f32.gmra.mxu0 %v1780
  %v1974 = vpop.f32.mrf.mxu0
  %v1975 = vadd.f32 %v1911, %v1974
  %1976 = vmatmul.f32.gmra.mxu0 %v1782
  %v1977 = vpop.f32.mrf.mxu0
  %v1978 = vadd.f32 %v1911, %v1977
  %1979 = vmatmul.f32.gmra.mxu0 %v1784
  %v1980 = vpop.f32.mrf.mxu0
  %v1981 = vadd.f32 %v1911, %v1980
  %1982 = vmatmul.f32.gmra.mxu0 %v1786
  %v1983 = vpop.f32.mrf.mxu0
  %v1984 = vadd.f32 %v1911, %v1983
  %1985 = vmatmul.f32.gmra.mxu0 %v1788
  %v1986 = vpop.f32.mrf.mxu0
  %v1987 = vadd.f32 %v1911, %v1986
  %1988 = vmatmul.f32.gmra.mxu0 %v1790
  %v1989 = vpop.f32.mrf.mxu0
  %v1990 = vadd.f32 %v1911, %v1989
  %1991 = vmatmul.f32.gmra.mxu0 %v1792
  %v1992 = vpop.f32.mrf.mxu0
  %v1993 = vadd.f32 %v1911, %v1992
  %1994 = vmatmul.f32.gmra.mxu0 %v1794
  %v1995 = vpop.f32.mrf.mxu0
  %v1996 = vadd.f32 %v1911, %v1995
  %1997 = vmatmul.f32.gmra.mxu0 %v1796
  %v1998 = vpop.f32.mrf.mxu0
  %v1999 = vadd.f32 %v1911, %v1998
  %2000 = vmatmul.f32.gmra.mxu0 %v1798
  %v2001 = vpop.f32.mrf.mxu0
  %v2002 = vadd.f32 %v1911, %v2001
  %2003 = vmatmul.f32.gmra.mxu0 %v1800
  %v2004 = vpop.f32.mrf.mxu0
  %v2005 = vadd.f32 %v1911, %v2004
  %2006 = vmatmul.f32.gmra.mxu0 %v1802
  %v2007 = vpop.f32.mrf.mxu0
  %v2008 = vadd.f32 %v1911, %v2007
  %2009 = vmatmul.f32.gmra.mxu0 %v1804
  %v2010 = vpop.f32.mrf.mxu0
  %v2011 = vadd.f32 %v1911, %v2010
  %2012 = vmatmul.f32.gmra.mxu0 %v1806
  %v2013 = vpop.f32.mrf.mxu0
  %v2014 = vadd.f32 %v1911, %v2013
  %2015 = vmatmul.f32.gmra.mxu0 %v1808
  %v2016 = vpop.f32.mrf.mxu0
  %v2017 = vadd.f32 %v1911, %v2016
  %2018 = vmatmul.f32.gmra.mxu0 %v1810
  %v2019 = vpop.f32.mrf.mxu0
  %v2020 = vadd.f32 %v1911, %v2019
  %2021 = vmatmul.f32.gmra.mxu0 %v1812
  %v2022 = vpop.f32.mrf.mxu0
  %v2023 = vadd.f32 %v1911, %v2022
  %2024 = vmatmul.f32.gmra.mxu0 %v1814
  %v2025 = vpop.f32.mrf.mxu0
  %v2026 = vadd.f32 %v1911, %v2025
  %2027 = vmatmul.f32.gmra.mxu0 %v1816
  %v2028 = vpop.f32.mrf.mxu0
  %v2029 = vadd.f32 %v1911, %v2028
  %2030 = vmatmul.f32.gmra.mxu0 %v1818
  %v2031 = vpop.f32.mrf.mxu0
  %v2032 = vadd.f32 %v1911, %v2031
  %2033 = vmatmul.f32.gmra.mxu0 %v1820
  %v2034 = vpop.f32.mrf.mxu0
  %v2035 = vadd.f32 %v1911, %v2034
  %2036 = vmatmul.f32.gmra.mxu0 %v1822
  %v2037 = vpop.f32.mrf.mxu0
  %v2038 = vadd.f32 %v1911, %v2037
  %2039 = vmatmul.f32.gmra.mxu0 %v1824
  %v2040 = vpop.f32.mrf.mxu0
  %v2041 = vadd.f32 %v1911, %v2040
  %2042 = vmatmul.f32.gmra.mxu0 %v1826
  %v2043 = vpop.f32.mrf.mxu0
  %v2044 = vadd.f32 %v1911, %v2043
  %2045 = vmatmul.f32.gmra.mxu0 %v1828
  %v2046 = vpop.f32.mrf.mxu0
  %v2047 = vadd.f32 %v1911, %v2046
  %2048 = vmatmul.f32.gmra.mxu0 %v1830
  %v2049 = vpop.f32.mrf.mxu0
  %v2050 = vadd.f32 %v1911, %v2049
  %2051 = vmatmul.f32.gmra.mxu0 %v1832
  %v2052 = vpop.f32.mrf.mxu0
  %v2053 = vadd.f32 %v1911, %v2052
  %2054 = vmatmul.f32.gmra.mxu0 %v1834
  %v2055 = vpop.f32.mrf.mxu0
  %v2056 = vadd.f32 %v1911, %v2055
  %2057 = vmatmul.f32.gmra.mxu0 %v1836
  %v2058 = vpop.f32.mrf.mxu0
  %v2059 = vadd.f32 %v1911, %v2058
  %2060 = vmatmul.f32.gmra.mxu0 %v1838
  %v2061 = vpop.f32.mrf.mxu0
  %v2062 = vadd.f32 %v1911, %v2061
  %2063 = vmatmul.f32.gmra.mxu0 %v1840
  %v2064 = vpop.f32.mrf.mxu0
  %v2065 = vadd.f32 %v1911, %v2064
  %2066 = vmatmul.f32.gmra.mxu0 %v1842
  %v2067 = vpop.f32.mrf.mxu0
  %v2068 = vadd.f32 %v1911, %v2067
  %2069 = vmatmul.f32.gmra.mxu0 %v1844
  %v2070 = vpop.f32.mrf.mxu0
  %v2071 = vadd.f32 %v1911, %v2070
  %2072 = vmatmul.f32.gmra.mxu0 %v1846
  %v2073 = vpop.f32.mrf.mxu0
  %v2074 = vadd.f32 %v1911, %v2073
  %2075 = vmatmul.f32.gmra.mxu0 %v1848
  %v2076 = vpop.f32.mrf.mxu0
  %v2077 = vadd.f32 %v1911, %v2076
  %2078 = vmatmul.f32.gmra.mxu0 %v1850
  %v2079 = vpop.f32.mrf.mxu0
  %v2080 = vadd.f32 %v1911, %v2079
  %2081 = vmatmul.f32.gmra.mxu0 %v1852
  %v2082 = vpop.f32.mrf.mxu0
  %v2083 = vadd.f32 %v1911, %v2082
  %2084 = vmatmul.f32.gmra.mxu0 %v1854
  %v2085 = vpop.f32.mrf.mxu0
  %v2086 = vadd.f32 %v1911, %v2085
  %2087 = vmatmul.f32.gmra.mxu0 %v1856
  %v2088 = vpop.f32.mrf.mxu0
  %v2089 = vadd.f32 %v1911, %v2088
  %2090 = vmatmul.f32.gmra.mxu0 %v1858
  %v2091 = vpop.f32.mrf.mxu0
  %v2092 = vadd.f32 %v1911, %v2091
  %2093 = vmatmul.f32.gmra.mxu0 %v1860
  %v2094 = vpop.f32.mrf.mxu0
  %v2095 = vadd.f32 %v1911, %v2094
  %2096 = vmatmul.f32.gmra.mxu0 %v1862
  %v2097 = vpop.f32.mrf.mxu0
  %v2098 = vadd.f32 %v1911, %v2097
  %2099 = vmatmul.f32.gmra.mxu0 %v1864
  %v2100 = vpop.f32.mrf.mxu0
  %v2101 = vadd.f32 %v1911, %v2100
  %2102 = vmatmul.f32.gmra.mxu0 %v1866
  %v2103 = vpop.f32.mrf.mxu0
  %v2104 = vadd.f32 %v1911, %v2103
  %2105 = vmatmul.f32.gmra.mxu0 %v1868
  %v2106 = vpop.f32.mrf.mxu0
  %v2107 = vadd.f32 %v1911, %v2106
  %2108 = vmatmul.f32.gmra.mxu0 %v1870
  %v2109 = vpop.f32.mrf.mxu0
  %v2110 = vadd.f32 %v1911, %v2109
  %2111 = vmatmul.f32.gmra.mxu0 %v1872
  %v2112 = vpop.f32.mrf.mxu0
  %v2113 = vadd.f32 %v1911, %v2112
  %2114 = vmatmul.f32.gmra.mxu0 %v1874
  %v2115 = vpop.f32.mrf.mxu0
  %v2116 = vadd.f32 %v1911, %v2115
  %2117 = vmatmul.f32.gmra.mxu0 %v1876
  %v2118 = vpop.f32.mrf.mxu0
  %v2119 = vadd.f32 %v1911, %v2118
  %2120 = vdwg.mxu0
  %2121 = vmatpush.msra.mxu0 %v1909
  %2122 = vmatpush.msra.mxu0 %v1908
  %2123 = vmatpush.msra.mxu0 %v1907
  %2124 = vmatpush.msra.mxu0 %v1906
  %2125 = vmatpush.msra.mxu0 %v1905
  %2126 = vmatpush.msra.mxu0 %v1904
  %2127 = vmatpush.msra.mxu0 %v1903
  %2128 = vmatpush.msra.mxu0 %v1902
  %2129 = vmatpush.msra.mxu0 %v1901
  %2130 = vmatpush.msra.mxu0 %v1900
  %2131 = vmatpush.msra.mxu0 %v1899
  %2132 = vmatpush.msra.mxu0 %v1898
  %2133 = vmatpush.msra.mxu0 %v1897
  %2134 = vmatpush.msra.mxu0 %v1896
  %2135 = vmatpush.msra.mxu0 %v1895
  %2136 = vmatpush.msra.mxu0 %v1894
  %2137 = vmatmul.f32.gmra.mxu0 %v1751
  %v2138 = vpop.f32.mrf.mxu0
  %v2139 = vadd.f32 %v1930, %v2138
  %2140 = vmatmul.f32.gmra.mxu0 %v1753
  %v2141 = vpop.f32.mrf.mxu0
  %v2142 = vadd.f32 %v1933, %v2141
  %2143 = vmatmul.f32.gmra.mxu0 %v1755
  %v2144 = vpop.f32.mrf.mxu0
  %v2145 = vadd.f32 %v1936, %v2144
  %2146 = vmatmul.f32.gmra.mxu0 %v1757
  %v2147 = vpop.f32.mrf.mxu0
  %v2148 = vadd.f32 %v1939, %v2147
  %2149 = vmatmul.f32.gmra.mxu0 %v1759
  %v2150 = vpop.f32.mrf.mxu0
  %v2151 = vadd.f32 %v1942, %v2150
  %2152 = vmatmul.f32.gmra.mxu0 %v1761
  %v2153 = vpop.f32.mrf.mxu0
  %v2154 = vadd.f32 %v1945, %v2153
  %2155 = vmatmul.f32.gmra.mxu0 %v1763
  %v2156 = vpop.f32.mrf.mxu0
  %v2157 = vadd.f32 %v1948, %v2156
  %2158 = vmatmul.f32.gmra.mxu0 %v1765
  %v2159 = vpop.f32.mrf.mxu0
  %v2160 = vadd.f32 %v1951, %v2159
  %2161 = vmatmul.f32.gmra.mxu0 %v1767
  %v2162 = vpop.f32.mrf.mxu0
  %v2163 = vadd.f32 %v1954, %v2162
  %2164 = vmatmul.f32.gmra.mxu0 %v1769
  %v2165 = vpop.f32.mrf.mxu0
  %v2166 = vadd.f32 %v1957, %v2165
  %2167 = vmatmul.f32.gmra.mxu0 %v1771
  %v2168 = vpop.f32.mrf.mxu0
  %v2169 = vadd.f32 %v1960, %v2168
  %2170 = vmatmul.f32.gmra.mxu0 %v1773
  %v2171 = vpop.f32.mrf.mxu0
  %v2172 = vadd.f32 %v1963, %v2171
  %2173 = vmatmul.f32.gmra.mxu0 %v1775
  %v2174 = vpop.f32.mrf.mxu0
  %v2175 = vadd.f32 %v1966, %v2174
  %2176 = vmatmul.f32.gmra.mxu0 %v1777
  %v2177 = vpop.f32.mrf.mxu0
  %v2178 = vadd.f32 %v1969, %v2177
  %2179 = vmatmul.f32.gmra.mxu0 %v1779
  %v2180 = vpop.f32.mrf.mxu0
  %v2181 = vadd.f32 %v1972, %v2180
  %2182 = vmatmul.f32.gmra.mxu0 %v1781
  %v2183 = vpop.f32.mrf.mxu0
  %v2184 = vadd.f32 %v1975, %v2183
  %2185 = vmatmul.f32.gmra.mxu0 %v1783
  %v2186 = vpop.f32.mrf.mxu0
  %v2187 = vadd.f32 %v1978, %v2186
  %2188 = vmatmul.f32.gmra.mxu0 %v1785
  %v2189 = vpop.f32.mrf.mxu0
  %v2190 = vadd.f32 %v1981, %v2189
  %2191 = vmatmul.f32.gmra.mxu0 %v1787
  %v2192 = vpop.f32.mrf.mxu0
  %v2193 = vadd.f32 %v1984, %v2192
  %2194 = vmatmul.f32.gmra.mxu0 %v1789
  %v2195 = vpop.f32.mrf.mxu0
  %v2196 = vadd.f32 %v1987, %v2195
  %2197 = vmatmul.f32.gmra.mxu0 %v1791
  %v2198 = vpop.f32.mrf.mxu0
  %v2199 = vadd.f32 %v1990, %v2198
  %2200 = vmatmul.f32.gmra.mxu0 %v1793
  %v2201 = vpop.f32.mrf.mxu0
  %v2202 = vadd.f32 %v1993, %v2201
  %2203 = vmatmul.f32.gmra.mxu0 %v1795
  %v2204 = vpop.f32.mrf.mxu0
  %v2205 = vadd.f32 %v1996, %v2204
  %2206 = vmatmul.f32.gmra.mxu0 %v1797
  %v2207 = vpop.f32.mrf.mxu0
  %v2208 = vadd.f32 %v1999, %v2207
  %2209 = vmatmul.f32.gmra.mxu0 %v1799
  %v2210 = vpop.f32.mrf.mxu0
  %v2211 = vadd.f32 %v2002, %v2210
  %2212 = vmatmul.f32.gmra.mxu0 %v1801
  %v2213 = vpop.f32.mrf.mxu0
  %v2214 = vadd.f32 %v2005, %v2213
  %2215 = vmatmul.f32.gmra.mxu0 %v1803
  %v2216 = vpop.f32.mrf.mxu0
  %v2217 = vadd.f32 %v2008, %v2216
  %2218 = vmatmul.f32.gmra.mxu0 %v1805
  %v2219 = vpop.f32.mrf.mxu0
  %v2220 = vadd.f32 %v2011, %v2219
  %2221 = vmatmul.f32.gmra.mxu0 %v1807
  %v2222 = vpop.f32.mrf.mxu0
  %v2223 = vadd.f32 %v2014, %v2222
  %2224 = vmatmul.f32.gmra.mxu0 %v1809
  %v2225 = vpop.f32.mrf.mxu0
  %v2226 = vadd.f32 %v2017, %v2225
  %2227 = vmatmul.f32.gmra.mxu0 %v1811
  %v2228 = vpop.f32.mrf.mxu0
  %v2229 = vadd.f32 %v2020, %v2228
  %2230 = vmatmul.f32.gmra.mxu0 %v1813
  %v2231 = vpop.f32.mrf.mxu0
  %v2232 = vadd.f32 %v2023, %v2231
  %2233 = vmatmul.f32.gmra.mxu0 %v1815
  %v2234 = vpop.f32.mrf.mxu0
  %v2235 = vadd.f32 %v2026, %v2234
  %2236 = vmatmul.f32.gmra.mxu0 %v1817
  %v2237 = vpop.f32.mrf.mxu0
  %v2238 = vadd.f32 %v2029, %v2237
  %2239 = vmatmul.f32.gmra.mxu0 %v1819
  %v2240 = vpop.f32.mrf.mxu0
  %v2241 = vadd.f32 %v2032, %v2240
  %2242 = vmatmul.f32.gmra.mxu0 %v1821
  %v2243 = vpop.f32.mrf.mxu0
  %v2244 = vadd.f32 %v2035, %v2243
  %2245 = vmatmul.f32.gmra.mxu0 %v1823
  %v2246 = vpop.f32.mrf.mxu0
  %v2247 = vadd.f32 %v2038, %v2246
  %2248 = vmatmul.f32.gmra.mxu0 %v1825
  %v2249 = vpop.f32.mrf.mxu0
  %v2250 = vadd.f32 %v2041, %v2249
  %2251 = vmatmul.f32.gmra.mxu0 %v1827
  %v2252 = vpop.f32.mrf.mxu0
  %v2253 = vadd.f32 %v2044, %v2252
  %2254 = vmatmul.f32.gmra.mxu0 %v1829
  %v2255 = vpop.f32.mrf.mxu0
  %v2256 = vadd.f32 %v2047, %v2255
  %2257 = vmatmul.f32.gmra.mxu0 %v1831
  %v2258 = vpop.f32.mrf.mxu0
  %v2259 = vadd.f32 %v2050, %v2258
  %2260 = vmatmul.f32.gmra.mxu0 %v1833
  %v2261 = vpop.f32.mrf.mxu0
  %v2262 = vadd.f32 %v2053, %v2261
  %2263 = vmatmul.f32.gmra.mxu0 %v1835
  %v2264 = vpop.f32.mrf.mxu0
  %v2265 = vadd.f32 %v2056, %v2264
  %2266 = vmatmul.f32.gmra.mxu0 %v1837
  %v2267 = vpop.f32.mrf.mxu0
  %v2268 = vadd.f32 %v2059, %v2267
  %2269 = vmatmul.f32.gmra.mxu0 %v1839
  %v2270 = vpop.f32.mrf.mxu0
  %v2271 = vadd.f32 %v2062, %v2270
  %2272 = vmatmul.f32.gmra.mxu0 %v1841
  %v2273 = vpop.f32.mrf.mxu0
  %v2274 = vadd.f32 %v2065, %v2273
  %2275 = vmatmul.f32.gmra.mxu0 %v1843
  %v2276 = vpop.f32.mrf.mxu0
  %v2277 = vadd.f32 %v2068, %v2276
  %2278 = vmatmul.f32.gmra.mxu0 %v1845
  %v2279 = vpop.f32.mrf.mxu0
  %v2280 = vadd.f32 %v2071, %v2279
  %2281 = vmatmul.f32.gmra.mxu0 %v1847
  %v2282 = vpop.f32.mrf.mxu0
  %v2283 = vadd.f32 %v2074, %v2282
  %2284 = vmatmul.f32.gmra.mxu0 %v1849
  %v2285 = vpop.f32.mrf.mxu0
  %v2286 = vadd.f32 %v2077, %v2285
  %2287 = vmatmul.f32.gmra.mxu0 %v1851
  %v2288 = vpop.f32.mrf.mxu0
  %v2289 = vadd.f32 %v2080, %v2288
  %2290 = vmatmul.f32.gmra.mxu0 %v1853
  %v2291 = vpop.f32.mrf.mxu0
  %v2292 = vadd.f32 %v2083, %v2291
  %2293 = vmatmul.f32.gmra.mxu0 %v1855
  %v2294 = vpop.f32.mrf.mxu0
  %v2295 = vadd.f32 %v2086, %v2294
  %2296 = vmatmul.f32.gmra.mxu0 %v1857
  %v2297 = vpop.f32.mrf.mxu0
  %v2298 = vadd.f32 %v2089, %v2297
  %2299 = vmatmul.f32.gmra.mxu0 %v1859
  %v2300 = vpop.f32.mrf.mxu0
  %v2301 = vadd.f32 %v2092, %v2300
  %2302 = vmatmul.f32.gmra.mxu0 %v1861
  %v2303 = vpop.f32.mrf.mxu0
  %v2304 = vadd.f32 %v2095, %v2303
  %2305 = vmatmul.f32.gmra.mxu0 %v1863
  %v2306 = vpop.f32.mrf.mxu0
  %v2307 = vadd.f32 %v2098, %v2306
  %2308 = vmatmul.f32.gmra.mxu0 %v1865
  %v2309 = vpop.f32.mrf.mxu0
  %v2310 = vadd.f32 %v2101, %v2309
  %2311 = vmatmul.f32.gmra.mxu0 %v1867
  %v2312 = vpop.f32.mrf.mxu0
  %v2313 = vadd.f32 %v2104, %v2312
  %2314 = vmatmul.f32.gmra.mxu0 %v1869
  %v2315 = vpop.f32.mrf.mxu0
  %v2316 = vadd.f32 %v2107, %v2315
  %2317 = vmatmul.f32.gmra.mxu0 %v1871
  %v2318 = vpop.f32.mrf.mxu0
  %v2319 = vadd.f32 %v2110, %v2318
  %2320 = vmatmul.f32.gmra.mxu0 %v1873
  %v2321 = vpop.f32.mrf.mxu0
  %v2322 = vadd.f32 %v2113, %v2321
  %2323 = vmatmul.f32.gmra.mxu0 %v1875
  %v2324 = vpop.f32.mrf.mxu0
  %v2325 = vadd.f32 %v2116, %v2324
  %2326 = vmatmul.f32.gmra.mxu0 %v1877
  %v2327 = vpop.f32.mrf.mxu0
  %v2328 = vadd.f32 %v2119, %v2327
  %2329 = vdwg.mxu0
  %2330 = vst [vmem:[%s7] sm:$0xff] %v2139
  %2331 = vst [vmem:[%s7 + $0x8] sm:$0xff] %v2142
  %2332 = vst [vmem:[%s7 + $0x10] sm:$0xff] %v2145
  %2333 = vst [vmem:[%s7 + $0x18] sm:$0xff] %v2148
  %2334 = vst [vmem:[%s7 + $0x20] sm:$0xff] %v2151
  %2335 = vst [vmem:[%s7 + $0x28] sm:$0xff] %v2154
  %2336 = vst [vmem:[%s7 + $0x30] sm:$0xff] %v2157
  %2337 = vst [vmem:[%s7 + $0x38] sm:$0xff] %v2160
  %2338 = vst [vmem:[%s7 + $0x40] sm:$0xff] %v2163
  %2339 = vst [vmem:[%s7 + $0x48] sm:$0xff] %v2166
  %2340 = vst [vmem:[%s7 + $0x50] sm:$0xff] %v2169
  %2341 = vst [vmem:[%s7 + $0x58] sm:$0xff] %v2172
  %2342 = vst [vmem:[%s7 + $0x60] sm:$0xff] %v2175
  %2343 = vst [vmem:[%s7 + $0x68] sm:$0xff] %v2178
  %2344 = vst [vmem:[%s7 + $0x70] sm:$0xff] %v2181
  %2345 = vst [vmem:[%s7 + $0x78] sm:$0xff] %v2184
  %2346 = vst [vmem:[%s7 + $0x80] sm:$0xff] %v2187
  %2347 = vst [vmem:[%s7 + $0x88] sm:$0xff] %v2190
  %2348 = vst [vmem:[%s7 + $0x90] sm:$0xff] %v2193
  %2349 = vst [vmem:[%s7 + $0x98] sm:$0xff] %v2196
  %2350 = vst [vmem:[%s7 + $0xa0] sm:$0xff] %v2199
  %2351 = vst [vmem:[%s7 + $0xa8] sm:$0xff] %v2202
  %2352 = vst [vmem:[%s7 + $0xb0] sm:$0xff] %v2205
  %2353 = vst [vmem:[%s7 + $0xb8] sm:$0xff] %v2208
  %2354 = vst [vmem:[%s7 + $0xc0] sm:$0xff] %v2211
  %2355 = vst [vmem:[%s7 + $0xc8] sm:$0xff] %v2214
  %2356 = vst [vmem:[%s7 + $0xd0] sm:$0xff] %v2217
  %2357 = vst [vmem:[%s7 + $0xd8] sm:$0xff] %v2220
  %2358 = vst [vmem:[%s7 + $0xe0] sm:$0xff] %v2223
  %2359 = vst [vmem:[%s7 + $0xe8] sm:$0xff] %v2226
  %2360 = vst [vmem:[%s7 + $0xf0] sm:$0xff] %v2229
  %2361 = vst [vmem:[%s7 + $0xf8] sm:$0xff] %v2232
  %2362 = vst [vmem:[%s7 + $0x100] sm:$0xff] %v2235
  %2363 = vst [vmem:[%s7 + $0x108] sm:$0xff] %v2238
  %2364 = vst [vmem:[%s7 + $0x110] sm:$0xff] %v2241
  %2365 = vst [vmem:[%s7 + $0x118] sm:$0xff] %v2244
  %2366 = vst [vmem:[%s7 + $0x120] sm:$0xff] %v2247
  %2367 = vst [vmem:[%s7 + $0x128] sm:$0xff] %v2250
  %2368 = vst [vmem:[%s7 + $0x130] sm:$0xff] %v2253
  %2369 = vst [vmem:[%s7 + $0x138] sm:$0xff] %v2256
  %2370 = vst [vmem:[%s7 + $0x140] sm:$0xff] %v2259
  %2371 = vst [vmem:[%s7 + $0x148] sm:$0xff] %v2262
  %2372 = vst [vmem:[%s7 + $0x150] sm:$0xff] %v2265
  %2373 = vst [vmem:[%s7 + $0x158] sm:$0xff] %v2268
  %2374 = vst [vmem:[%s7 + $0x160] sm:$0xff] %v2271
  %2375 = vst [vmem:[%s7 + $0x168] sm:$0xff] %v2274
  %2376 = vst [vmem:[%s7 + $0x170] sm:$0xff] %v2277
  %2377 = vst [vmem:[%s7 + $0x178] sm:$0xff] %v2280
  %2378 = vst [vmem:[%s7 + $0x180] sm:$0xff] %v2283
  %2379 = vst [vmem:[%s7 + $0x188] sm:$0xff] %v2286
  %2380 = vst [vmem:[%s7 + $0x190] sm:$0xff] %v2289
  %2381 = vst [vmem:[%s7 + $0x198] sm:$0xff] %v2292
  %2382 = vst [vmem:[%s7 + $0x1a0] sm:$0xff] %v2295
  %2383 = vst [vmem:[%s7 + $0x1a8] sm:$0xff] %v2298
  %2384 = vst [vmem:[%s7 + $0x1b0] sm:$0xff] %v2301
  %2385 = vst [vmem:[%s7 + $0x1b8] sm:$0xff] %v2304
  %2386 = vst [vmem:[%s7 + $0x1c0] sm:$0xff] %v2307
  %2387 = vst [vmem:[%s7 + $0x1c8] sm:$0xff] %v2310
  %2388 = vst [vmem:[%s7 + $0x1d0] sm:$0xff] %v2313
  %2389 = vst [vmem:[%s7 + $0x1d8] sm:$0xff] %v2316
  %2390 = vst [vmem:[%s7 + $0x1e0] sm:$0xff] %v2319
  %2391 = vst [vmem:[%s7 + $0x1e8] sm:$0xff] %v2322
  %2392 = vst [vmem:[%s7 + $0x1f0] sm:$0xff] %v2325
  %2393 = vst [vmem:[%s7 + $0x1f8] sm:$0xff] %v2328
  // Predicated region
  $region30: #{value_net_forward.1} parent=0 // pred_check
    _
  $region31: #{value_net_forward.1} parent=0 // pred_check_branch
    %2395 = sbr.rel (0) target = $region33
  $region32: #{value_net_forward.1} parent=0 // pred_region
    _
  $region33: #{value_net_forward.1} parent=0 // pred_fallthru
    _
  // Predicated region
  $region34: #{value_net_forward.1} parent=0 // pred_check
    _
  $region35: #{value_net_forward.1} parent=0 // pred_check_branch
    %2397 = sbr.rel (0) target = $region37
  $region36: #{value_net_forward.1} parent=0 // pred_region
    _
  $region37: #{value_net_forward.1} parent=0 // pred_fallthru
    _

</llo_original>
